<compile_context>
chip_gen: v7x
topology: tpu7x:2x2x1
jax: 0.10.0
libtpu: 0.0.40
codegen_flags: <defaults>
</compile_context>

<pallas_src>
import functools

import jax
import jax.numpy as jnp
import numpy as np
from jax import lax
from jax.experimental import pallas as pl
from jax.experimental.pallas import tpu as pltpu

EPS = 1e-5
_ONES_ROWS = 8  # sublane-aligned block of ones rows appended to the stats matmul


def _can_kernel(src_ref, trg_ref, wq_ref, wk_ref, wv_ref, out_ref, *, inv_temp):
    # src_ref: (C, Ts) f32, trg_ref: (C, Tt) f32, w*_ref: (C, C) bf16 torch (out, in).
    src = src_ref[...].astype(jnp.float32)                     # (C, Ts)
    trg = trg_ref[...].astype(jnp.float32)                     # (C, Tt)
    C = src.shape[0]
    Tt = trg.shape[1]

    def inorm(x):
        # Instance norm over time (lane axis), per channel, unbiased variance + eps.
        n = x.shape[1]
        mu = jnp.mean(x, axis=1, keepdims=True)
        d = x - mu
        var = jnp.sum(d * d, axis=1, keepdims=True) * (1.0 / (n - 1))
        return d * lax.rsqrt(var + EPS)                         # EUP rsqrt, no VPU divide

    src_n = inorm(src)                                          # (C, Ts) f32
    trg_n = inorm(trg)                                          # (C, Tt) f32

    bf = jnp.bfloat16
    wq = wq_ref[...]                                            # already bf16 (wrapper cast)
    wk = wk_ref[...]
    wv = wv_ref[...]

    # Only re-layout in the kernel: time-major view of normalized src for the Q
    # path.  Cast to bf16 BEFORE transposing -> half the XLU traffic.
    src_nt = jnp.transpose(src_n.astype(bf))                    # (Ts, C) bf16
    # TODO(synk): evaluate the transpose-free form (wq @ src_n, logits via
    # dot_general contracting dim 0 of both) once verified via pl.lower_as_mlir
    # that Mosaic does not re-insert an XLU transpose.

    # Q projection in (Ts, C): contract last dims of both operands (x @ W.T form).
    sq = lax.dot_general(src_nt, wq, (((1,), (1,)), ((), ())),
                         preferred_element_type=jnp.float32)    # (Ts, C)
    # K / V projections stay channel-major: (C,C) @ (C,Tt) — native MXU.
    tk = jnp.dot(wk, trg_n.astype(bf), preferred_element_type=jnp.float32)  # (C, Tt)
    tv = jnp.dot(wv, trg.astype(bf), preferred_element_type=jnp.float32)    # (C, Tt)

    # logits = (src_q / temp) @ trg_k.T  ==  (sq @ tk) * (1/temp)
    logits = jnp.dot(sq.astype(bf), tk.astype(bf),
                     preferred_element_type=jnp.float32) * inv_temp          # (Ts, Tt)
    logits = logits - jnp.max(logits, axis=-1, keepdims=True)
    p = jnp.exp(logits).astype(bf)                              # UNNORMALIZED numerator

    # Fused stats matmul with deferred softmax normalization:
    #   aug = [v ; v^2 ; ones] (2C+8, Tt) contracted with p on the shared Tt axis.
    #   rows [0, C)   -> unnormalized E[v]   numerators        (C, Ts)
    #   rows [C, 2C)  -> unnormalized E[v^2] numerators        (C, Ts)
    #   row  2C       -> per-query softmax denominator, lane-dense (1, Ts)
    # The denominator comes from the same bf16 p as the numerators (consistent
    # rounding) and needs no (Ts,1)->(1,Ts) relayout or (Ts,Tt) VPU multiply.
    aug = jnp.concatenate(
        [tv.astype(bf), (tv * tv).astype(bf), jnp.ones((_ONES_ROWS, Tt), bf)], axis=0)
    stats = lax.dot_general(aug, p, (((1,), (1,)), ((), ())),
                            preferred_element_type=jnp.float32)              # (2C+8, Ts)

    inv_denom = pl.reciprocal(stats[2 * C:2 * C + 1], approx=False)          # (1, Ts)
    mean_a = stats[:C] * inv_denom                                           # (C, Ts)
    ex2 = stats[C:2 * C] * inv_denom                                         # (C, Ts)
    var_a = jnp.maximum(ex2 - mean_a * mean_a, 0.0)                          # relu

    mean_c = jnp.mean(mean_a, axis=1, keepdims=True)                         # (C, 1)
    std_c = jnp.sqrt(jnp.mean(var_a, axis=1, keepdims=True))                 # (C, 1)

    # Lane-dense store: last dim is Ts (time on the 128-lane axis).
    out_ref[...] = (std_c * src_n + mean_c).astype(out_ref.dtype)


def _vmem_limit_bytes():
    """Generation-aware scoped-VMEM request.

    v7x has only 64 MiB physical VMEM per TensorCore, so asking for all of it
    starves compiler scratch; cap at 3/4 of physical.  v5e/v6e (128 MiB) get the
    full 64 MiB (ample for whole-sequence blocks at these sizes).
    """
    try:
        cap = int(pltpu.get_tpu_info().vmem_capacity_bytes)
    except Exception:  # conservative fallback if the query is unavailable
        cap = 128 * 1024 * 1024
    return int(min(64 * 1024 * 1024, cap * 3 // 4))


def channel_adaptive_normalization(src, trg, w_q, w_k, w_v):
    """src, trg: (B, C, T) float32.  w_*: (C, C) torch-Linear weights (y = x @ W.T)."""
    B, C, Ts = src.shape
    Tt = trg.shape[2]
    inv_temp = 1.0 / (float(C) ** 0.5)

    # Cast weights to bf16 once here (they are MXU operands anyway): halves the
    # weight HBM->VMEM DMA + VMEM residency and removes the in-kernel casts.
    wq_bf = w_q.astype(jnp.bfloat16)
    wk_bf = w_k.astype(jnp.bfloat16)
    wv_bf = w_v.astype(jnp.bfloat16)

    # Constant index_map -> single-buffer the weight blocks (double-buffering a
    # block that never changes only wastes VMEM).
    w_spec = pl.BlockSpec((C, C), lambda b: (0, 0), pipeline_mode=pl.Buffered(1))

    kernel = functools.partial(_can_kernel, inv_temp=inv_temp)
    return pl.pallas_call(
        kernel,
        out_shape=jax.ShapeDtypeStruct((B, C, Ts), src.dtype),
        grid=(B,),
        in_specs=[
            # Leading batch dim squeezed (None) -> kernel sees clean (C, T) refs.
            pl.BlockSpec((None, C, Ts), lambda b: (b, 0, 0)),
            pl.BlockSpec((None, C, Tt), lambda b: (b, 0, 0)),
            w_spec, w_spec, w_spec,
        ],
        out_specs=pl.BlockSpec((None, C, Ts), lambda b: (b, 0, 0)),
        compiler_params=pltpu.CompilerParams(
            dimension_semantics=("parallel",),
            vmem_limit_bytes=_vmem_limit_bytes(),
        ),
    )(src, trg, wq_bf, wk_bf, wv_bf)


def _reference(src, trg, w_q, w_k, w_v):
    """Pure-JAX f32 reference mirroring the PyTorch forward."""
    C = src.shape[1]
    temp = float(C) ** 0.5

    def inorm(x):  # x: (B, C, T)
        mu = jnp.mean(x, axis=-1, keepdims=True)
        var = jnp.var(x, axis=-1, ddof=1, keepdims=True)
        return (x - mu) / jnp.sqrt(var + EPS)

    src_n = inorm(src)
    trg_n = inorm(trg)
    sq = jnp.einsum("bct,dc->btd", src_n, w_q)
    tk = jnp.einsum("bct,dc->btd", trg_n, w_k)
    tv = jnp.einsum("bct,dc->btd", trg, w_v)
    attn = jax.nn.softmax(jnp.einsum("bqc,bkc->bqk", sq / temp, tk), axis=-1)
    mean = jnp.einsum("bqk,bkc->bqc", attn, tv)
    var = jnp.maximum(jnp.einsum("bqk,bkc->bqc", attn, tv * tv) - mean * mean, 0.0)
    mean_c = jnp.mean(mean, axis=1)          # (B, C)
    std_c = jnp.sqrt(jnp.mean(var, axis=1))  # (B, C)
    return std_c[:, :, None] * src_n + mean_c[:, :, None]


if __name__ == "__main__":
    # Small shapes, but both time axes are multiples of 128 (lane-dense vregs,
    # per the review), and Ts != Tt so any transposition bug is a shape error.
    B, C, Ts, Tt = 2, 32, 128, 256

    key = jax.random.PRNGKey(0)
    k_src, k_trg, k_q, k_k, k_v = jax.random.split(key, 5)

    src = jax.random.normal(k_src, (B, C, Ts), dtype=jnp.float32)
    trg = jax.random.normal(k_trg, (B, C, Tt), dtype=jnp.float32)

    # Deterministic torch.nn.Linear-style init: U(-1/sqrt(C), 1/sqrt(C)), shape (out, in).
    bound = 1.0 / (C ** 0.5)
    w_q = jax.random.uniform(k_q, (C, C), jnp.float32, -bound, bound)
    w_k = jax.random.uniform(k_k, (C, C), jnp.float32, -bound, bound)
    w_v = jax.random.uniform(k_v, (C, C), jnp.float32, -bound, bound)

    out = channel_adaptive_normalization(src, trg, w_q, w_k, w_v)
    out = jax.block_until_ready(out)

    ref = jax.block_until_ready(_reference(src, trg, w_q, w_k, w_v))
    assert out.shape == (B, C, Ts), out.shape
    # Tolerance covers bf16 MXU operands (f32 accumulation, f32 softmax & stats).
    np.testing.assert_allclose(np.asarray(out), np.asarray(ref), rtol=2e-2, atol=2e-2)

    print("KERNEL_OK")
</pallas_src>

<mosaic_0001>
module attributes {stable_mosaic.version = 11 : i64} {
  func.func @_can_kernel(%arg0: i32, %arg1: memref<1x32x128xf32, #tpu.memory_space<vmem>>, %arg2: memref<1x32x256xf32, #tpu.memory_space<vmem>>, %arg3: memref<32x32xbf16, #tpu.memory_space<vmem>>, %arg4: memref<32x32xbf16, #tpu.memory_space<vmem>>, %arg5: memref<32x32xbf16, #tpu.memory_space<vmem>>, %arg6: memref<1x32x128xf32, #tpu.memory_space<vmem>>) attributes {dimension_semantics = [#tpu.dimension_semantics<parallel>], iteration_bounds = array<i64: 2>, scalar_prefetch = 0 : i64, scratch_operands = 0 : i64, tpu.core_type = #tpu.core_type<tc>, window_params = [{transform_indices = @transform_0, window_bounds = array<i64: 1, 32, 128>}, {transform_indices = @transform_1, window_bounds = array<i64: 1, 32, 256>}, {pipeline_mode = #tpu.pipeline_mode<synchronous>, transform_indices = @transform_2, window_bounds = array<i64: 32, 32>}, {pipeline_mode = #tpu.pipeline_mode<synchronous>, transform_indices = @transform_3, window_bounds = array<i64: 32, 32>}, {pipeline_mode = #tpu.pipeline_mode<synchronous>, transform_indices = @transform_4, window_bounds = array<i64: 32, 32>}, {transform_indices = @transform_5, window_bounds = array<i64: 1, 32, 128>}]} {
    %c0 = arith.constant 0 : index
    %c0_0 = arith.constant 0 : index
    %c0_1 = arith.constant 0 : index
    %0 = vector.load %arg1[%c0, %c0_0, %c0_1] : memref<1x32x128xf32, #tpu.memory_space<vmem>>, vector<1x32x128xf32>
    %1 = vector.shape_cast %0 : vector<1x32x128xf32> to vector<32x128xf32>
    %c0_2 = arith.constant 0 : index
    %c0_3 = arith.constant 0 : index
    %c0_4 = arith.constant 0 : index
    %2 = vector.load %arg2[%c0_2, %c0_3, %c0_4] : memref<1x32x256xf32, #tpu.memory_space<vmem>>, vector<1x32x256xf32>
    %3 = vector.shape_cast %2 : vector<1x32x256xf32> to vector<32x256xf32>
    %cst = arith.constant dense<0.000000e+00> : vector<32xf32>
    %4 = vector.multi_reduction <add>, %1, %cst [1] : vector<32x128xf32> to vector<32xf32>
    %5 = vector.shape_cast %4 : vector<32xf32> to vector<32x1xf32>
    %cst_5 = arith.constant 1.280000e+02 : f32
    %6 = vector.broadcast %cst_5 : f32 to vector<32x1xf32>
    %7 = arith.divf %5, %6 : vector<32x1xf32>
    %8 = vector.broadcast %7 : vector<32x1xf32> to vector<32x128xf32>
    %9 = arith.subf %1, %8 : vector<32x128xf32>
    %10 = arith.mulf %9, %9 : vector<32x128xf32>
    %cst_6 = arith.constant dense<0.000000e+00> : vector<32xf32>
    %11 = vector.multi_reduction <add>, %10, %cst_6 [1] : vector<32x128xf32> to vector<32xf32>
    %12 = vector.shape_cast %11 : vector<32xf32> to vector<32x1xf32>
    %cst_7 = arith.constant 0.00787401571 : f32
    %13 = vector.broadcast %cst_7 : f32 to vector<32x1xf32>
    %14 = arith.mulf %12, %13 : vector<32x1xf32>
    %cst_8 = arith.constant 9.99999974E-6 : f32
    %15 = vector.broadcast %cst_8 : f32 to vector<32x1xf32>
    %16 = arith.addf %14, %15 : vector<32x1xf32>
    %17 = math.rsqrt %16 : vector<32x1xf32>
    %18 = vector.broadcast %17 : vector<32x1xf32> to vector<32x128xf32>
    %19 = arith.mulf %9, %18 : vector<32x128xf32>
    %cst_9 = arith.constant dense<0.000000e+00> : vector<32xf32>
    %20 = vector.multi_reduction <add>, %3, %cst_9 [1] : vector<32x256xf32> to vector<32xf32>
    %21 = vector.shape_cast %20 : vector<32xf32> to vector<32x1xf32>
    %cst_10 = arith.constant 2.560000e+02 : f32
    %22 = vector.broadcast %cst_10 : f32 to vector<32x1xf32>
    %23 = arith.divf %21, %22 : vector<32x1xf32>
    %24 = vector.broadcast %23 : vector<32x1xf32> to vector<32x256xf32>
    %25 = arith.subf %3, %24 : vector<32x256xf32>
    %26 = arith.mulf %25, %25 : vector<32x256xf32>
    %cst_11 = arith.constant dense<0.000000e+00> : vector<32xf32>
    %27 = vector.multi_reduction <add>, %26, %cst_11 [1] : vector<32x256xf32> to vector<32xf32>
    %28 = vector.shape_cast %27 : vector<32xf32> to vector<32x1xf32>
    %cst_12 = arith.constant 0.00392156886 : f32
    %29 = vector.broadcast %cst_12 : f32 to vector<32x1xf32>
    %30 = arith.mulf %28, %29 : vector<32x1xf32>
    %cst_13 = arith.constant 9.99999974E-6 : f32
    %31 = vector.broadcast %cst_13 : f32 to vector<32x1xf32>
    %32 = arith.addf %30, %31 : vector<32x1xf32>
    %33 = math.rsqrt %32 : vector<32x1xf32>
    %34 = vector.broadcast %33 : vector<32x1xf32> to vector<32x256xf32>
    %35 = arith.mulf %25, %34 : vector<32x256xf32>
    %c0_14 = arith.constant 0 : index
    %c0_15 = arith.constant 0 : index
    %36 = vector.load %arg3[%c0_14, %c0_15] : memref<32x32xbf16, #tpu.memory_space<vmem>>, vector<32x32xbf16>
    %c0_16 = arith.constant 0 : index
    %c0_17 = arith.constant 0 : index
    %37 = vector.load %arg4[%c0_16, %c0_17] : memref<32x32xbf16, #tpu.memory_space<vmem>>, vector<32x32xbf16>
    %c0_18 = arith.constant 0 : index
    %c0_19 = arith.constant 0 : index
    %38 = vector.load %arg5[%c0_18, %c0_19] : memref<32x32xbf16, #tpu.memory_space<vmem>>, vector<32x32xbf16>
    %39 = arith.truncf %19 : vector<32x128xf32> to vector<32x128xbf16>
    %40 = tpu.transpose %39, [1, 0] : vector<32x128xbf16> -> vector<128x32xbf16>
    %cst_20 = arith.constant dense<0.000000e+00> : vector<128x32xf32>
    %41 = tpu.matmul %40, %36, %cst_20 {dimension_numbers = #tpu.dot_dimension_numbers<[1], [1], [0], [0], [0, 0, 1, 0], [], []>} : vector<128x32xbf16>, vector<32x32xbf16>, vector<128x32xf32> -> vector<128x32xf32>
    %42 = arith.truncf %35 : vector<32x256xf32> to vector<32x256xbf16>
    %cst_21 = arith.constant dense<0.000000e+00> : vector<32x256xf32>
    %43 = tpu.matmul %37, %42, %cst_21 {dimension_numbers = #tpu.dot_dimension_numbers<[1], [0], [0], [1], [0, 0, 1, 1], [], []>} : vector<32x32xbf16>, vector<32x256xbf16>, vector<32x256xf32> -> vector<32x256xf32>
    %44 = arith.truncf %3 : vector<32x256xf32> to vector<32x256xbf16>
    %cst_22 = arith.constant dense<0.000000e+00> : vector<32x256xf32>
    %45 = tpu.matmul %38, %44, %cst_22 {dimension_numbers = #tpu.dot_dimension_numbers<[1], [0], [0], [1], [0, 0, 1, 1], [], []>} : vector<32x32xbf16>, vector<32x256xbf16>, vector<32x256xf32> -> vector<32x256xf32>
    %46 = arith.truncf %41 : vector<128x32xf32> to vector<128x32xbf16>
    %47 = arith.truncf %43 : vector<32x256xf32> to vector<32x256xbf16>
    %cst_23 = arith.constant dense<0.000000e+00> : vector<128x256xf32>
    %48 = tpu.matmul %46, %47, %cst_23 {dimension_numbers = #tpu.dot_dimension_numbers<[1], [0], [0], [1], [0, 0, 1, 1], [], []>} : vector<128x32xbf16>, vector<32x256xbf16>, vector<128x256xf32> -> vector<128x256xf32>
    %cst_24 = arith.constant 0.176776692 : f32
    %49 = vector.broadcast %cst_24 : f32 to vector<128x256xf32>
    %50 = arith.mulf %48, %49 : vector<128x256xf32>
    %cst_25 = arith.constant dense<0xFF800000> : vector<128xf32>
    %51 = vector.multi_reduction <maximumf>, %50, %cst_25 [1] : vector<128x256xf32> to vector<128xf32>
    %52 = vector.shape_cast %51 : vector<128xf32> to vector<128x1xf32>
    %53 = vector.broadcast %52 : vector<128x1xf32> to vector<128x256xf32>
    %54 = arith.subf %50, %53 : vector<128x256xf32>
    %55 = math.exp %54 : vector<128x256xf32>
    %56 = arith.truncf %55 : vector<128x256xf32> to vector<128x256xbf16>
    %57 = arith.truncf %45 : vector<32x256xf32> to vector<32x256xbf16>
    %58 = arith.mulf %45, %45 : vector<32x256xf32>
    %59 = arith.truncf %58 : vector<32x256xf32> to vector<32x256xbf16>
    %cst_26 = arith.constant 1.000000e+00 : bf16
    %60 = vector.broadcast %cst_26 : bf16 to vector<8x256xbf16>
    %61 = tpu.concatenate %57, %59, %60 in 0 : vector<32x256xbf16>, vector<32x256xbf16>, vector<8x256xbf16> -> vector<72x256xbf16>
    %cst_27 = arith.constant dense<0.000000e+00> : vector<72x128xf32>
    %62 = tpu.matmul %61, %56, %cst_27 {dimension_numbers = #tpu.dot_dimension_numbers<[1], [1], [0], [0], [0, 0, 1, 0], [], []>} : vector<72x256xbf16>, vector<128x256xbf16>, vector<72x128xf32> -> vector<72x128xf32>
    %63 = vector.extract_strided_slice %62 {offsets = [64, 0], sizes = [1, 128], strides = [1, 1]} : vector<72x128xf32> to vector<1x128xf32>
    %64 = tpu.reciprocal %63 : vector<1x128xf32> -> vector<1x128xf32>
    %65 = vector.extract_strided_slice %62 {offsets = [0, 0], sizes = [32, 128], strides = [1, 1]} : vector<72x128xf32> to vector<32x128xf32>
    %66 = vector.broadcast %64 : vector<1x128xf32> to vector<32x128xf32>
    %67 = arith.mulf %65, %66 : vector<32x128xf32>
    %68 = vector.extract_strided_slice %62 {offsets = [32, 0], sizes = [32, 128], strides = [1, 1]} : vector<72x128xf32> to vector<32x128xf32>
    %69 = vector.broadcast %64 : vector<1x128xf32> to vector<32x128xf32>
    %70 = arith.mulf %68, %69 : vector<32x128xf32>
    %71 = arith.mulf %67, %67 : vector<32x128xf32>
    %72 = arith.subf %70, %71 : vector<32x128xf32>
    %cst_28 = arith.constant 0.000000e+00 : f32
    %73 = vector.broadcast %cst_28 : f32 to vector<32x128xf32>
    %74 = arith.maximumf %72, %73 : vector<32x128xf32>
    %cst_29 = arith.constant dense<0.000000e+00> : vector<32xf32>
    %75 = vector.multi_reduction <add>, %67, %cst_29 [1] : vector<32x128xf32> to vector<32xf32>
    %76 = vector.shape_cast %75 : vector<32xf32> to vector<32x1xf32>
    %cst_30 = arith.constant 1.280000e+02 : f32
    %77 = vector.broadcast %cst_30 : f32 to vector<32x1xf32>
    %78 = arith.divf %76, %77 : vector<32x1xf32>
    %cst_31 = arith.constant dense<0.000000e+00> : vector<32xf32>
    %79 = vector.multi_reduction <add>, %74, %cst_31 [1] : vector<32x128xf32> to vector<32xf32>
    %80 = vector.shape_cast %79 : vector<32xf32> to vector<32x1xf32>
    %cst_32 = arith.constant 1.280000e+02 : f32
    %81 = vector.broadcast %cst_32 : f32 to vector<32x1xf32>
    %82 = arith.divf %80, %81 : vector<32x1xf32>
    %83 = math.sqrt %82 : vector<32x1xf32>
    %84 = vector.broadcast %83 : vector<32x1xf32> to vector<32x128xf32>
    %85 = arith.mulf %84, %19 : vector<32x128xf32>
    %86 = vector.broadcast %78 : vector<32x1xf32> to vector<32x128xf32>
    %87 = arith.addf %85, %86 : vector<32x128xf32>
    %c0_33 = arith.constant 0 : index
    %c0_34 = arith.constant 0 : index
    %c0_35 = arith.constant 0 : index
    %88 = vector.load %arg6[%c0_33, %c0_34, %c0_35] : memref<1x32x128xf32, #tpu.memory_space<vmem>>, vector<1x32x128xf32>
    %89 = vector.shape_cast %88 : vector<1x32x128xf32> to vector<32x128xf32>
    %90 = vector.shape_cast %87 : vector<32x128xf32> to vector<1x32x128xf32>
    tpu.vector_store %arg6[%c0_33, %c0_34, %c0_35], %90 {strides = array<i32>} : memref<1x32x128xf32, #tpu.memory_space<vmem>>, vector<1x32x128xf32>,
    return
  }
  func.func @transform_0(%arg0: i32) -> (i32, i32, i32) {
    %c0_i32 = arith.constant 0 : i32
    %c0_i32_0 = arith.constant 0 : i32
    %c0_i32_1 = arith.constant 0 : i32
    return %arg0, %c0_i32, %c0_i32_0 : i32, i32, i32
  }
  func.func @transform_1(%arg0: i32) -> (i32, i32, i32) {
    %c0_i32 = arith.constant 0 : i32
    %c0_i32_0 = arith.constant 0 : i32
    %c0_i32_1 = arith.constant 0 : i32
    return %arg0, %c0_i32, %c0_i32_0 : i32, i32, i32
  }
  func.func @transform_2(%arg0: i32) -> (i32, i32) {
    %c0_i32 = arith.constant 0 : i32
    %c0_i32_0 = arith.constant 0 : i32
    %c0_i32_1 = arith.constant 0 : i32
    return %c0_i32, %c0_i32_0 : i32, i32
  }
  func.func @transform_3(%arg0: i32) -> (i32, i32) {
    %c0_i32 = arith.constant 0 : i32
    %c0_i32_0 = arith.constant 0 : i32
    %c0_i32_1 = arith.constant 0 : i32
    return %c0_i32, %c0_i32_0 : i32, i32
  }
  func.func @transform_4(%arg0: i32) -> (i32, i32) {
    %c0_i32 = arith.constant 0 : i32
    %c0_i32_0 = arith.constant 0 : i32
    %c0_i32_1 = arith.constant 0 : i32
    return %c0_i32, %c0_i32_0 : i32, i32
  }
  func.func @transform_5(%arg0: i32) -> (i32, i32, i32) {
    %c0_i32 = arith.constant 0 : i32
    %c0_i32_0 = arith.constant 0 : i32
    %c0_i32_1 = arith.constant 0 : i32
    return %arg0, %c0_i32, %c0_i32_0 : i32, i32, i32
  }
}

</mosaic_0001>

<llo_original>
// kernel: tpu_custom_call.1
$region0: #{tpu_custom_call.1}
  #allocation0 [shape = 'u32[]', space=smem, size = 0x4, offset = 0x4, fixed_abs, tag = 'smem constant byte address 0x4 - core index']
  #allocation1 [shape = 'u32[144,128]{1,0:T(1,128)}', space=vmem, size = 0x12000, scoped, tag = 'internal scratch']
  %s0 = inlined_call_operand.hbm [shape: f32[2,32,128], index: 0, kind: input, shape index: {}]
  %s1 = inlined_call_operand.hbm [shape: f32[2,32,256], index: 1, kind: input, shape index: {}]
  %s2 = inlined_call_operand.hbm [shape: bf16[32,32], index: 2, kind: input, shape index: {}]
  %s3 = inlined_call_operand.hbm [shape: bf16[32,32], index: 3, kind: input, shape index: {}]
  %s4 = inlined_call_operand.hbm [shape: bf16[32,32], index: 4, kind: input, shape index: {}]
  %s5 = inlined_call_operand.hbm [shape: f32[2,32,128], index: 5, kind: output, shape index: {}]
  %s6 = sld [smem:[#allocation0]]
  $region73: #{tpu_custom_call.1} parent=0
    _
  %s8 = ssub.s32 1, %s6
  %s9 = scalar_select 0, %s8, %s6
  $region1: #{tpu_custom_call.1} parent=0
    #allocation2 [shape = 'u8[32768]{0}', space=vmem, size = 0x8000, scoped, tag = 'input window, operand 0']
    #allocation3 [shape = 's32[2]{0}', space=sflag, size = 0x8, scoped, tag = 'scoped memory for tpu_custom_call.1']
    #allocation4 [shape = 's32[2]{0}', space=sflag, size = 0x8, scoped, tag = 'scoped memory for tpu_custom_call.1']
    #allocation5 [shape = 'u8[65536]{0}', space=vmem, size = 0x10000, scoped, tag = 'input window, operand 1']
    #allocation6 [shape = 's32[2]{0}', space=sflag, size = 0x8, scoped, tag = 'scoped memory for tpu_custom_call.1']
    #allocation7 [shape = 'u8[8192]{0}', space=vmem, size = 0x2000, scoped, tag = 'input window, operand 2, single buffered']
    #allocation8 [shape = 'u8[8192]{0}', space=vmem, size = 0x2000, scoped, tag = 'input window, operand 3, single buffered']
    #allocation9 [shape = 's32[1]{0}', space=sflag, size = 0x4, scoped, tag = 'scoped memory for tpu_custom_call.1']
    #allocation10 [shape = 'u8[8192]{0}', space=vmem, size = 0x2000, scoped, tag = 'input window, operand 4, single buffered']
    #allocation11 [shape = 'u8[32768]{0}', space=vmem, size = 0x8000, scoped, tag = 'output window, operand 0']
    %10 = vsyncpa [#allocation3], 0
    %s11 = scalar_lea.sflag [#allocation3], 1
    %12 = vsyncpa %s11, 0
    %13 = vsyncpa [#allocation6], 0
    %s14 = scalar_lea.sflag [#allocation6], 1
    %15 = vsyncpa %s14, 0
    %16 = vsyncpa [#allocation9], 0
    %17 = vsyncpa [#allocation4], 0
    %s18 = scalar_lea.sflag [#allocation4], 1
    %19 = vsyncpa %s18, 0
    loop: start=0, step=1, limit=4
    $region2: #{tpu_custom_call.1} parent=1 // loop_pre_header
      _
    $region3: #{tpu_custom_call.1} parent=1 // loop_header
      %s21 = sphi 0, %s25
      %p22 = scmp.ge.s32.totalorder %s21, 4
      %s31 = sphi 0, %s33
      %s34 = sphi 0, %s31
      %s35 = sphi 0, %s34
      %s51 = sphi 0, %s35
      %s57 = sphi 0, %s59
      %s60 = sphi 0, %s57
      %s61 = sphi 0, %s60
      %s77 = sphi 0, %s61
      %s81 = sphi 0, %s81
      %s83 = sphi 0, %s81
      %s84 = sphi 0, %s83
      %s98 = sphi 0, %s84
      %s102 = sphi 0, %s102
      %s104 = sphi 0, %s102
      %s105 = sphi 0, %s104
      %s119 = sphi 0, %s105
      %s123 = sphi 0, %s123
      %s125 = sphi 0, %s123
      %s126 = sphi 0, %s125
      %s140 = sphi 0, %s126
      %s146 = sphi 0, %s148
      %s149 = sphi 0, %s146
      %s150 = sphi 0, %s149
      %s166 = sphi 0, %s150
    $region4: #{tpu_custom_call.1} parent=1 // loop_header_branch
      %24 = sbr.rel (%p22) target = $region8
    $region5: #{tpu_custom_call.1} parent=1 // loop_body
      %s26 = ssub.s32 %s21, 1
      %s27 = ssub.s32 %s21, 2
      %s28 = sadd.s32 %s21, 1
      %s29 = ssub.s32 %s21, %s28
      %p30 = scmp.eq.s32.totalorder %s29, 0
      %s32 = sadd.s32 %s31, 1
      %s33 = scalar_select %p30, %s31, %s32
      %p36 = pneg %p30
      %p37 = scmp.eq.s32.totalorder %s21, 1
      %p38 = por %p36, %p37
      %p39 = scmp.ne.s32.totalorder %s31, %s34
      %p40 = scmp.eq.s32.totalorder %s21, 0
      %p41 = por %p39, %p40
      %p42 = scmp.ne.s32.totalorder %s31, %s34
      %p43 = scmp.eq.s32.totalorder %s26, 1
      %p44 = por %p42, %p43
      %p45 = scmp.ne.s32.totalorder %s34, %s35
      %p46 = scmp.eq.s32.totalorder %s26, 0
      %p47 = por %p45, %p46
      %p48 = scmp.ne.s32.totalorder %s34, %s35
      %p49 = scmp.eq.s32.totalorder %s27, 1
      %p50 = por %p48, %p49
      %p52 = scmp.ne.s32.totalorder %s35, %s51
      %p53 = scmp.eq.s32.totalorder %s27, 0
      %p54 = por %p52, %p53
      %s55 = ssub.s32 %s21, %s28
      %p56 = scmp.eq.s32.totalorder %s55, 0
      %s58 = sadd.s32 %s57, 1
      %s59 = scalar_select %p56, %s57, %s58
      %p62 = pneg %p56
      %p63 = scmp.eq.s32.totalorder %s21, 1
      %p64 = por %p62, %p63
      %p65 = scmp.ne.s32.totalorder %s57, %s60
      %p66 = scmp.eq.s32.totalorder %s21, 0
      %p67 = por %p65, %p66
      %p68 = scmp.ne.s32.totalorder %s57, %s60
      %p69 = scmp.eq.s32.totalorder %s26, 1
      %p70 = por %p68, %p69
      %p71 = scmp.ne.s32.totalorder %s60, %s61
      %p72 = scmp.eq.s32.totalorder %s26, 0
      %p73 = por %p71, %p72
      %p74 = scmp.ne.s32.totalorder %s60, %s61
      %p75 = scmp.eq.s32.totalorder %s27, 1
      %p76 = por %p74, %p75
      %p78 = scmp.ne.s32.totalorder %s61, %s77
      %p79 = scmp.eq.s32.totalorder %s27, 0
      %p80 = por %p78, %p79
      %s82 = sadd.s32 %s81, 1
      %p85 = scmp.eq.s32.totalorder %s21, 1
      %p86 = scmp.ne.s32.totalorder %s81, %s83
      %p87 = scmp.eq.s32.totalorder %s21, 0
      %p88 = por %p86, %p87
      %p89 = scmp.ne.s32.totalorder %s81, %s83
      %p90 = scmp.eq.s32.totalorder %s26, 1
      %p91 = por %p89, %p90
      %p92 = scmp.ne.s32.totalorder %s83, %s84
      %p93 = scmp.eq.s32.totalorder %s26, 0
      %p94 = por %p92, %p93
      %p95 = scmp.ne.s32.totalorder %s83, %s84
      %p96 = scmp.eq.s32.totalorder %s27, 1
      %p97 = por %p95, %p96
      %p99 = scmp.ne.s32.totalorder %s84, %s98
      %p100 = scmp.eq.s32.totalorder %s27, 0
      %p101 = por %p99, %p100
      %s103 = sadd.s32 %s102, 1
      %p106 = scmp.eq.s32.totalorder %s21, 1
      %p107 = scmp.ne.s32.totalorder %s102, %s104
      %p108 = scmp.eq.s32.totalorder %s21, 0
      %p109 = por %p107, %p108
      %p110 = scmp.ne.s32.totalorder %s102, %s104
      %p111 = scmp.eq.s32.totalorder %s26, 1
      %p112 = por %p110, %p111
      %p113 = scmp.ne.s32.totalorder %s104, %s105
      %p114 = scmp.eq.s32.totalorder %s26, 0
      %p115 = por %p113, %p114
      %p116 = scmp.ne.s32.totalorder %s104, %s105
      %p117 = scmp.eq.s32.totalorder %s27, 1
      %p118 = por %p116, %p117
      %p120 = scmp.ne.s32.totalorder %s105, %s119
      %p121 = scmp.eq.s32.totalorder %s27, 0
      %p122 = por %p120, %p121
      %s124 = sadd.s32 %s123, 1
      %p127 = scmp.eq.s32.totalorder %s21, 1
      %p128 = scmp.ne.s32.totalorder %s123, %s125
      %p129 = scmp.eq.s32.totalorder %s21, 0
      %p130 = por %p128, %p129
      %p131 = scmp.ne.s32.totalorder %s123, %s125
      %p132 = scmp.eq.s32.totalorder %s26, 1
      %p133 = por %p131, %p132
      %p134 = scmp.ne.s32.totalorder %s125, %s126
      %p135 = scmp.eq.s32.totalorder %s26, 0
      %p136 = por %p134, %p135
      %p137 = scmp.ne.s32.totalorder %s125, %s126
      %p138 = scmp.eq.s32.totalorder %s27, 1
      %p139 = por %p137, %p138
      %p141 = scmp.ne.s32.totalorder %s126, %s140
      %p142 = scmp.eq.s32.totalorder %s27, 0
      %p143 = por %p141, %p142
      %s144 = ssub.s32 %s21, %s28
      %p145 = scmp.eq.s32.totalorder %s144, 0
      %s147 = sadd.s32 %s146, 1
      %s148 = scalar_select %p145, %s146, %s147
      %p151 = pneg %p145
      %p152 = scmp.eq.s32.totalorder %s21, 1
      %p153 = por %p151, %p152
      %p154 = scmp.ne.s32.totalorder %s146, %s149
      %p155 = scmp.eq.s32.totalorder %s21, 0
      %p156 = por %p154, %p155
      %p157 = scmp.ne.s32.totalorder %s146, %s149
      %p158 = scmp.eq.s32.totalorder %s26, 1
      %p159 = por %p157, %p158
      %p160 = scmp.ne.s32.totalorder %s149, %s150
      %p161 = scmp.eq.s32.totalorder %s26, 0
      %p162 = por %p160, %p161
      %p163 = scmp.ne.s32.totalorder %s149, %s150
      %p164 = scmp.eq.s32.totalorder %s27, 1
      %p165 = por %p163, %p164
      %p167 = scmp.ne.s32.totalorder %s150, %s166
      %p168 = scmp.eq.s32.totalorder %s27, 0
      %p169 = por %p167, %p168
      %p170 = scmp.le.s32.totalorder 1, %s21
      %p171 = scmp.lt.s32.totalorder %s21, 3
      %p172 = pnand %p170, %p171
      %p173 = pneg %p172
      // Predicated region
      $region9: #{tpu_custom_call.1} parent=5 // pred_check
        _
      $region10: #{tpu_custom_call.1} parent=5 // pred_check_branch
        %175 = sbr.rel (%p172) target = $region12
      $region11: #{tpu_custom_call.1} parent=5 // pred_region
        %s176 = ssub.s32 %s21, 1
        // Predicated region
        $region13: #{tpu_custom_call.1} parent=11 // pred_check
          %p177 = pneg %p94
        $region14: #{tpu_custom_call.1} parent=11 // pred_check_branch
          %179 = sbr.rel (%p177) target = $region16
        $region15: #{tpu_custom_call.1} parent=11 // pred_region
          %s181 = ssub.s32 256, 256
          %182 = vsyncadd [#allocation6], %s181
          %s183 = sshll.u32 [#allocation7], 4
          %s184 = int_to_ptr.vmem [resolvable:$true] %s183
          %189 = dma.hbm_to_vmem [thread:$0]  %s2, 256, %s184, [#allocation6], 64, 64, 4
        $region16: #{tpu_custom_call.1} parent=11 // pred_fallthru
          _
        // Predicated region
        $region17: #{tpu_custom_call.1} parent=11 // pred_check
          %p190 = pneg %p115
        $region18: #{tpu_custom_call.1} parent=11 // pred_check_branch
          %192 = sbr.rel (%p190) target = $region20
        $region19: #{tpu_custom_call.1} parent=11 // pred_region
          %s194 = ssub.s32 256, 256
          %195 = vsyncadd [#allocation9], %s194
          %s196 = sshll.u32 [#allocation8], 4
          %s197 = int_to_ptr.vmem [resolvable:$true] %s196
          %202 = dma.hbm_to_vmem [thread:$0]  %s3, 256, %s197, [#allocation9], 64, 64, 4
        $region20: #{tpu_custom_call.1} parent=11 // pred_fallthru
          _
        // Predicated region
        $region21: #{tpu_custom_call.1} parent=11 // pred_check
          %p203 = pneg %p136
        $region22: #{tpu_custom_call.1} parent=11 // pred_check_branch
          %205 = sbr.rel (%p203) target = $region24
        $region23: #{tpu_custom_call.1} parent=11 // pred_region
          %s207 = ssub.s32 256, 256
          %208 = vsyncadd [#allocation9], %s207
          %s209 = sshll.u32 [#allocation10], 4
          %s210 = int_to_ptr.vmem [resolvable:$true] %s209
          %215 = dma.hbm_to_vmem [thread:$0]  %s4, 256, %s210, [#allocation9], 64, 64, 4
        $region24: #{tpu_custom_call.1} parent=11 // pred_fallthru
          _
      $region12: #{tpu_custom_call.1} parent=5 // pred_fallthru
        _
      %p216 = scmp.lt.s32.totalorder %s21, 2
      // Predicated region
      $region25: #{tpu_custom_call.1} parent=5 // pred_check
        %p217 = pneg %p216
      $region26: #{tpu_custom_call.1} parent=5 // pred_check_branch
        %219 = sbr.rel (%p217) target = $region28
      $region27: #{tpu_custom_call.1} parent=5 // pred_region
        // Predicated region
        $region29: #{tpu_custom_call.1} parent=27 // pred_check
          %p220 = pneg %p41
        $region30: #{tpu_custom_call.1} parent=27 // pred_check_branch
          %222 = sbr.rel (%p220) target = $region32
        $region31: #{tpu_custom_call.1} parent=27 // pred_region
          %s223 = sand.u32 %s31, 1
          %s224 = scalar_lea.sflag [#allocation3], %s223
          %s225 = sand.u32 %s31, 1
          %s226 = smul.addr %s225, 32
          %s227 = scalar_lea.vmem [#allocation2], %s226
          %s229 = ssub.s32 512, 512
          %230 = vsyncadd %s224, %s229
          %s231 = smul.addr %s21, 4
          %s232 = smul.addr %s231, 128
          %s233 = scalar_lea.hbm %s0, %s232
          %s234 = sshll.u32 %s227, 4
          %s235 = int_to_ptr.vmem [resolvable:$true] %s234
          %240 = dma.hbm_to_vmem [thread:$0]  %s233, 512, %s235, %s224, 128, 128, 8
        $region32: #{tpu_custom_call.1} parent=27 // pred_fallthru
          _
        // Predicated region
        $region33: #{tpu_custom_call.1} parent=27 // pred_check
          %p241 = pneg %p67
        $region34: #{tpu_custom_call.1} parent=27 // pred_check_branch
          %243 = sbr.rel (%p241) target = $region36
        $region35: #{tpu_custom_call.1} parent=27 // pred_region
          %s244 = sand.u32 %s21, 1
          %s245 = scalar_lea.sflag [#allocation6], %s244
          %s246 = sand.u32 %s57, 1
          %s247 = smul.addr %s246, 64
          %s248 = scalar_lea.vmem [#allocation5], %s247
          %s250 = ssub.s32 1024, 1024
          %251 = vsyncadd %s245, %s250
          %s252 = smul.addr %s21, 8
          %s253 = smul.addr %s252, 128
          %s254 = scalar_lea.hbm %s1, %s253
          %s255 = sshll.u32 %s248, 4
          %s256 = int_to_ptr.vmem [resolvable:$true] %s255
          %261 = dma.hbm_to_vmem [thread:$0]  %s254, 1024, %s256, %s245, 256, 256, 16
        $region36: #{tpu_custom_call.1} parent=27 // pred_fallthru
          _
      $region28: #{tpu_custom_call.1} parent=5 // pred_fallthru
        _
      %p262 = scmp.le.s32.totalorder 1, %s21
      %p263 = scmp.lt.s32.totalorder %s21, 3
      %p264 = pnand %p262, %p263
      %p265 = pneg %p264
      // Predicated region
      $region37: #{tpu_custom_call.1} parent=5 // pred_check
        _
      $region38: #{tpu_custom_call.1} parent=5 // pred_check_branch
        %267 = sbr.rel (%p264) target = $region40
      $region39: #{tpu_custom_call.1} parent=5 // pred_region
        %s268 = ssub.s32 %s21, 1
        %s269 = sand.u32 %s34, 1
        %s270 = scalar_lea.sflag [#allocation3], %s269
        %s271 = sand.u32 %s34, 1
        %s272 = smul.addr %s271, 32
        %s273 = scalar_lea.vmem [#allocation2], %s272
        // Predicated region
        $region41: #{tpu_custom_call.1} parent=39 // pred_check
          %p274 = pneg %p47
        $region42: #{tpu_custom_call.1} parent=39 // pred_check_branch
          %276 = sbr.rel (%p274) target = $region44
        $region43: #{tpu_custom_call.1} parent=39 // pred_region
          %277 = dma.done %s270, 512
        $region44: #{tpu_custom_call.1} parent=39 // pred_fallthru
          _
        %s278 = sand.u32 %s26, 1
        %s279 = scalar_lea.sflag [#allocation6], %s278
        %s280 = sand.u32 %s60, 1
        %s281 = smul.addr %s280, 64
        %s282 = scalar_lea.vmem [#allocation5], %s281
        // Predicated region
        $region45: #{tpu_custom_call.1} parent=39 // pred_check
          %p283 = pneg %p73
        $region46: #{tpu_custom_call.1} parent=39 // pred_check_branch
          %285 = sbr.rel (%p283) target = $region48
        $region47: #{tpu_custom_call.1} parent=39 // pred_region
          %286 = dma.done %s279, 1024
        $region48: #{tpu_custom_call.1} parent=39 // pred_fallthru
          _
        // Predicated region
        $region49: #{tpu_custom_call.1} parent=39 // pred_check
          %p287 = pneg %p94
        $region50: #{tpu_custom_call.1} parent=39 // pred_check_branch
          %289 = sbr.rel (%p287) target = $region52
        $region51: #{tpu_custom_call.1} parent=39 // pred_region
          %290 = dma.done [#allocation6], 256
        $region52: #{tpu_custom_call.1} parent=39 // pred_fallthru
          _
        // Predicated region
        $region53: #{tpu_custom_call.1} parent=39 // pred_check
          %p291 = pneg %p115
        $region54: #{tpu_custom_call.1} parent=39 // pred_check_branch
          %293 = sbr.rel (%p291) target = $region56
        $region55: #{tpu_custom_call.1} parent=39 // pred_region
          %294 = dma.done [#allocation9], 256
        $region56: #{tpu_custom_call.1} parent=39 // pred_fallthru
          _
        // Predicated region
        $region57: #{tpu_custom_call.1} parent=39 // pred_check
          %p295 = pneg %p136
        $region58: #{tpu_custom_call.1} parent=39 // pred_check_branch
          %297 = sbr.rel (%p295) target = $region60
        $region59: #{tpu_custom_call.1} parent=39 // pred_region
          %298 = dma.done [#allocation9], 256
        $region60: #{tpu_custom_call.1} parent=39 // pred_fallthru
          _
        %s299 = sand.u32 %s34, 1
        %s300 = scalar_lea.sflag [#allocation3], %s299
        %s301 = sand.u32 %s34, 1
        %s302 = smul.addr %s301, 32
        %s303 = scalar_lea.vmem [#allocation2], %s302
        %p304 = pneg %p47
        %p305 = pneg %p44
        %s306 = sand.u32 %s26, 1
        %s307 = scalar_lea.sflag [#allocation6], %s306
        %s308 = sand.u32 %s60, 1
        %s309 = smul.addr %s308, 64
        %s310 = scalar_lea.vmem [#allocation5], %s309
        %p311 = pneg %p73
        %p312 = pneg %p70
        %p313 = pneg %p94
        %p314 = pneg %p91
        %p315 = pneg %p115
        %p316 = pneg %p112
        %p317 = pneg %p136
        %p318 = pneg %p133
        %p319 = pneg %p162
        %p320 = pneg %p159
        %s321 = sand.u32 %s149, 1
        %s322 = scalar_lea.sflag [#allocation4], %s321
        %s323 = sand.u32 %s149, 1
        %s324 = smul.addr %s323, 32
        %s325 = scalar_lea.vmem [#allocation11], %s324
        %v328 = vld [vmem:[%s273] sm:$0xff]
        %v329 = vld [vmem:[%s273 + $0x8] sm:$0xff]
        %v330 = vld [vmem:[%s273 + $0x10] sm:$0xff]
        %v331 = vld [vmem:[%s273 + $0x18] sm:$0xff]
        %v332 = vld [vmem:[%s282] sm:$0xff]
        %v333 = vld [vmem:[%s282 + $0x8] sm:$0xff]
        %v334 = vld [vmem:[%s282 + $0x10] sm:$0xff]
        %v335 = vld [vmem:[%s282 + $0x18] sm:$0xff]
        %v336 = vld [vmem:[%s282 + $0x20] sm:$0xff]
        %v337 = vld [vmem:[%s282 + $0x28] sm:$0xff]
        %v338 = vld [vmem:[%s282 + $0x30] sm:$0xff]
        %v339 = vld [vmem:[%s282 + $0x38] sm:$0xff]
        %340 = vadd.xlane.f32.xlu0 %v328
        %v341 = vpop.xlane.xlu0 %340
        %342 = vadd.xlane.f32.xlu0 %v329
        %v343 = vpop.xlane.xlu0 %342
        %344 = vadd.xlane.f32.xlu0 %v330
        %v345 = vpop.xlane.xlu0 %344
        %346 = vadd.xlane.f32.xlu0 %v331
        %v347 = vpop.xlane.xlu0 %346
        %v348 = vrcp.pop 128.0
        %v349 = vmul.f32 %v341, %v348
        %v350 = vmul.f32 %v343, %v348
        %v351 = vmul.f32 %v345, %v348
        %v352 = vmul.f32 %v347, %v348
        %v353 = vsub.f32 %v328, %v349
        %v354 = vsub.f32 %v329, %v350
        %v355 = vsub.f32 %v330, %v351
        %v356 = vsub.f32 %v331, %v352
        %v357 = vmul.f32 %v353, %v353
        %v358 = vmul.f32 %v354, %v354
        %v359 = vmul.f32 %v355, %v355
        %v360 = vmul.f32 %v356, %v356
        %361 = vadd.xlane.f32.xlu0 %v357
        %v362 = vpop.xlane.xlu0 %361
        %363 = vadd.xlane.f32.xlu0 %v358
        %v364 = vpop.xlane.xlu0 %363
        %365 = vadd.xlane.f32.xlu0 %v359
        %v366 = vpop.xlane.xlu0 %365
        %367 = vadd.xlane.f32.xlu0 %v360
        %v368 = vpop.xlane.xlu0 %367
        %v369 = vmul.f32 %v362, 0.007874016
        %v370 = vmul.f32 %v364, 0.007874016
        %v371 = vmul.f32 %v366, 0.007874016
        %v372 = vmul.f32 %v368, 0.007874016
        %v373 = vadd.f32 %v369, 1e-05
        %v374 = vadd.f32 %v370, 1e-05
        %v375 = vadd.f32 %v371, 1e-05
        %v376 = vadd.f32 %v372, 1e-05
        %v377 = vrsqrt.pop %v373
        %v378 = vrsqrt.pop %v374
        %v379 = vrsqrt.pop %v375
        %v380 = vrsqrt.pop %v376
        %v381 = vmul.f32 %v353, %v377
        %v382 = vmul.f32 %v354, %v378
        %v383 = vmul.f32 %v355, %v379
        %v384 = vmul.f32 %v356, %v380
        %v385 = vadd.f32 %v332, %v333
        %386 = vadd.xlane.f32.xlu0 %v385
        %v387 = vpop.xlane.xlu0 %386
        %v388 = vadd.f32 %v334, %v335
        %389 = vadd.xlane.f32.xlu0 %v388
        %v390 = vpop.xlane.xlu0 %389
        %v391 = vadd.f32 %v336, %v337
        %392 = vadd.xlane.f32.xlu0 %v391
        %v393 = vpop.xlane.xlu0 %392
        %v394 = vadd.f32 %v338, %v339
        %395 = vadd.xlane.f32.xlu0 %v394
        %v396 = vpop.xlane.xlu0 %395
        %v397 = vrcp.pop 256.0
        %v398 = vmul.f32 %v387, %v397
        %v399 = vmul.f32 %v390, %v397
        %v400 = vmul.f32 %v393, %v397
        %v401 = vmul.f32 %v396, %v397
        %v402 = vsub.f32 %v332, %v398
        %v403 = vsub.f32 %v333, %v398
        %v404 = vsub.f32 %v334, %v399
        %v405 = vsub.f32 %v335, %v399
        %v406 = vsub.f32 %v336, %v400
        %v407 = vsub.f32 %v337, %v400
        %v408 = vsub.f32 %v338, %v401
        %v409 = vsub.f32 %v339, %v401
        %v410 = vmul.f32 %v402, %v402
        %v411 = vmul.f32 %v403, %v403
        %v412 = vmul.f32 %v404, %v404
        %v413 = vmul.f32 %v405, %v405
        %v414 = vmul.f32 %v406, %v406
        %v415 = vmul.f32 %v407, %v407
        %v416 = vmul.f32 %v408, %v408
        %v417 = vmul.f32 %v409, %v409
        %v418 = vadd.f32 %v410, %v411
        %419 = vadd.xlane.f32.xlu0 %v418
        %v420 = vpop.xlane.xlu0 %419
        %v421 = vadd.f32 %v412, %v413
        %422 = vadd.xlane.f32.xlu0 %v421
        %v423 = vpop.xlane.xlu0 %422
        %v424 = vadd.f32 %v414, %v415
        %425 = vadd.xlane.f32.xlu0 %v424
        %v426 = vpop.xlane.xlu0 %425
        %v427 = vadd.f32 %v416, %v417
        %428 = vadd.xlane.f32.xlu0 %v427
        %v429 = vpop.xlane.xlu0 %428
        %v430 = vmul.f32 %v420, 0.003921569
        %v431 = vmul.f32 %v423, 0.003921569
        %v432 = vmul.f32 %v426, 0.003921569
        %v433 = vmul.f32 %v429, 0.003921569
        %v434 = vadd.f32 %v430, 1e-05
        %v435 = vadd.f32 %v431, 1e-05
        %v436 = vadd.f32 %v432, 1e-05
        %v437 = vadd.f32 %v433, 1e-05
        %v438 = vrsqrt.pop %v434
        %v439 = vrsqrt.pop %v435
        %v440 = vrsqrt.pop %v436
        %v441 = vrsqrt.pop %v437
        %v442 = vmul.f32 %v402, %v438
        %v443 = vmul.f32 %v403, %v438
        %v444 = vmul.f32 %v404, %v439
        %v445 = vmul.f32 %v405, %v439
        %v446 = vmul.f32 %v406, %v440
        %v447 = vmul.f32 %v407, %v440
        %v448 = vmul.f32 %v408, %v441
        %v449 = vmul.f32 %v409, %v441
        %v450 = vld [vmem:[#allocation7] sm:$0xf]
        %v451 = vld [vmem:[#allocation7 + $0x4] sm:$0xf]
        %v452 = vld [vmem:[#allocation7 + $0x8] sm:$0xf]
        %v453 = vld [vmem:[#allocation7 + $0xc] sm:$0xf]
        %v454 = vld [vmem:[#allocation8] sm:$0xf]
        %v455 = vld [vmem:[#allocation8 + $0x4] sm:$0xf]
        %v456 = vld [vmem:[#allocation8 + $0x8] sm:$0xf]
        %v457 = vld [vmem:[#allocation8 + $0xc] sm:$0xf]
        %v458 = vld [vmem:[#allocation10] sm:$0xf]
        %v459 = vld [vmem:[#allocation10 + $0x4] sm:$0xf]
        %v460 = vld [vmem:[#allocation10 + $0x8] sm:$0xf]
        %v461 = vld [vmem:[#allocation10 + $0xc] sm:$0xf]
        %v462 = vpack.c.bf16 %v382, %v381
        %v463 = vpack.c.bf16 %v384, %v383
        %464 = vxpose.xlu0.c.b16.start [1/8] %v462, 128
        %465 = vxpose.xlu0.c.b16.cont [2/8] %v463, 128
        %466 = vxpose.xlu0.c.b16.cont [3/8] 0, 128
        %467 = vxpose.xlu0.c.b16.cont [4/8] 0, 128
        %468 = vxpose.xlu0.c.b16.cont [5/8] 0, 128
        %469 = vxpose.xlu0.c.b16.cont [6/8] 0, 128
        %470 = vxpose.xlu0.c.b16.cont [7/8] 0, 128
        %471 = vxpose.xlu0.c.b16.end [8/8] 0, 128
        %v472 = vpop.trf.xlu0
        %v473 = vpop.trf.xlu0
        %v474 = vpop.trf.xlu0
        %v475 = vpop.trf.xlu0
        %v476 = vpop.trf.xlu0
        %v477 = vpop.trf.xlu0
        %v478 = vpop.trf.xlu0
        %v479 = vpop.trf.xlu0
        %v484 = vunpack.c.l.b16 %v450
        %v485 = vunpack.c.l.b16 %v451
        %v486 = vunpack.c.l.b16 %v452
        %v487 = vunpack.c.l.b16 %v453
        %v488 = vpack.c.b16 %v485, %v484
        %v489 = vpack.c.b16 %v487, %v486
        %vm490 = vcmask 261120
        %v492 = vsel %vm490, %v472, 0
        %v495 = vsel %vm490, %v473, 0
        %v498 = vsel %vm490, %v474, 0
        %v501 = vsel %vm490, %v475, 0
        %v504 = vsel %vm490, %v476, 0
        %v507 = vsel %vm490, %v477, 0
        %v510 = vsel %vm490, %v478, 0
        %v513 = vsel %vm490, %v479, 0
        %v516 = vsel %vm490, %v488, 0
        %v519 = vsel %vm490, %v489, 0
        %521 = vmatprep.subr.bf16.mxu0 0
        %522 = vmatpush1.bf16.xpose.msra.mxu0 %v516
        %523 = vmatprep.subr.bf16.mxu0 0
        %524 = vmatpush1.bf16.xpose.msra.mxu0 %v519
        %525 = vmatprep.subr.bf16.mxu0 0
        %526 = vmatpush1.bf16.xpose.msra.mxu0 0
        %527 = vmatprep.subr.bf16.mxu0 0
        %528 = vmatpush1.bf16.xpose.msra.mxu0 0
        %529 = vmatprep.subr.bf16.mxu0 0
        %530 = vmatpush1.bf16.xpose.msra.mxu0 0
        %531 = vmatprep.subr.bf16.mxu0 0
        %532 = vmatpush1.bf16.xpose.msra.mxu0 0
        %533 = vmatprep.subr.bf16.mxu0 0
        %534 = vmatpush1.bf16.xpose.msra.mxu0 0
        %535 = vmatprep.subr.bf16.mxu0 0
        %536 = vmatpush1.bf16.xpose.msra.mxu0 0
        %537 = vmatprep.subr.bf16.mxu0 0
        %538 = vmatpush1.bf16.xpose.msra.mxu0 0
        %539 = vmatprep.subr.bf16.mxu0 0
        %540 = vmatpush1.bf16.xpose.msra.mxu0 0
        %541 = vmatprep.subr.bf16.mxu0 0
        %542 = vmatpush1.bf16.xpose.msra.mxu0 0
        %543 = vmatprep.subr.bf16.mxu0 0
        %544 = vmatpush1.bf16.xpose.msra.mxu0 0
        %545 = vmatprep.subr.bf16.mxu0 0
        %546 = vmatpush1.bf16.xpose.msra.mxu0 0
        %547 = vmatprep.subr.bf16.mxu0 0
        %548 = vmatpush1.bf16.xpose.msra.mxu0 0
        %549 = vmatprep.subr.bf16.mxu0 0
        %550 = vmatpush1.bf16.xpose.msra.mxu0 0
        %551 = vmatprep.subr.bf16.mxu0 0
        %552 = vmatpush1.bf16.xpose.msra.mxu0 0
        %553 = vmatprep.mubr.bf16.mxu0 0
        %554 = vmatmul.mubr.bf16.gmra.mrb[0].mxu0 %v492
        %v555 = vpop.f32.mrb[0].mxu0
        %v556 = vadd.f32 0.0, %v555
        %v557 = vpop.f32.mrb[0].mxu0
        %v558 = vpop.f32.mrb[0].mxu0
        %v559 = vadd.f32 0.0, %v558
        %v560 = vpop.f32.mrb[0].mxu0
        %561 = vmatprep.mubr.bf16.mxu0 0
        %562 = vmatmul.mubr.bf16.gmra.mrb[0].mxu0 %v495
        %v563 = vpop.f32.mrb[0].mxu0
        %v564 = vadd.f32 0.0, %v563
        %v565 = vpop.f32.mrb[0].mxu0
        %v566 = vpop.f32.mrb[0].mxu0
        %v567 = vadd.f32 0.0, %v566
        %v568 = vpop.f32.mrb[0].mxu0
        %569 = vmatprep.mubr.bf16.mxu0 0
        %570 = vmatmul.mubr.bf16.gmra.mrb[0].mxu0 %v498
        %v571 = vpop.f32.mrb[0].mxu0
        %v572 = vadd.f32 0.0, %v571
        %v573 = vpop.f32.mrb[0].mxu0
        %v574 = vpop.f32.mrb[0].mxu0
        %v575 = vadd.f32 0.0, %v574
        %v576 = vpop.f32.mrb[0].mxu0
        %577 = vmatprep.mubr.bf16.mxu0 0
        %578 = vmatmul.mubr.bf16.gmra.mrb[0].mxu0 %v501
        %v579 = vpop.f32.mrb[0].mxu0
        %v580 = vadd.f32 0.0, %v579
        %v581 = vpop.f32.mrb[0].mxu0
        %v582 = vpop.f32.mrb[0].mxu0
        %v583 = vadd.f32 0.0, %v582
        %v584 = vpop.f32.mrb[0].mxu0
        %585 = vmatprep.mubr.bf16.mxu0 0
        %586 = vmatmul.mubr.bf16.gmra.mrb[0].mxu0 %v504
        %v587 = vpop.f32.mrb[0].mxu0
        %v588 = vadd.f32 0.0, %v587
        %v589 = vpop.f32.mrb[0].mxu0
        %v590 = vpop.f32.mrb[0].mxu0
        %v591 = vadd.f32 0.0, %v590
        %v592 = vpop.f32.mrb[0].mxu0
        %593 = vmatprep.mubr.bf16.mxu0 0
        %594 = vmatmul.mubr.bf16.gmra.mrb[0].mxu0 %v507
        %v595 = vpop.f32.mrb[0].mxu0
        %v596 = vadd.f32 0.0, %v595
        %v597 = vpop.f32.mrb[0].mxu0
        %v598 = vpop.f32.mrb[0].mxu0
        %v599 = vadd.f32 0.0, %v598
        %v600 = vpop.f32.mrb[0].mxu0
        %601 = vmatprep.mubr.bf16.mxu0 0
        %602 = vmatmul.mubr.bf16.gmra.mrb[0].mxu0 %v510
        %v603 = vpop.f32.mrb[0].mxu0
        %v604 = vadd.f32 0.0, %v603
        %v605 = vpop.f32.mrb[0].mxu0
        %v606 = vpop.f32.mrb[0].mxu0
        %v607 = vadd.f32 0.0, %v606
        %v608 = vpop.f32.mrb[0].mxu0
        %609 = vmatprep.mubr.bf16.mxu0 0
        %610 = vmatmul.mubr.bf16.gmra.mrb[0].mxu0 %v513
        %v611 = vpop.f32.mrb[0].mxu0
        %v612 = vadd.f32 0.0, %v611
        %v613 = vpop.f32.mrb[0].mxu0
        %v614 = vpop.f32.mrb[0].mxu0
        %v615 = vadd.f32 0.0, %v614
        %v616 = vpop.f32.mrb[0].mxu0
        %617 = vdwg.mxu0
        %v618 = vpack.c.bf16 %v444, %v442
        %v619 = vpack.c.bf16 %v445, %v443
        %v620 = vpack.c.bf16 %v448, %v446
        %v621 = vpack.c.bf16 %v449, %v447
        %v626 = vunpack.c.l.b16 %v454
        %v627 = vunpack.c.l.b16 %v455
        %v628 = vunpack.c.l.b16 %v456
        %v629 = vunpack.c.l.b16 %v457
        %v630 = vpack.c.b16 %v627, %v626
        %v631 = vpack.c.b16 %v629, %v628
        %v633 = vsel %vm490, %v630, 0
        %v636 = vsel %vm490, %v631, 0
        %638 = vmatprep.subr.bf16.mxu0 %v619
        %639 = vmatpush1.bf16.msra.mxu0 %v618
        %640 = vmatprep.subr.bf16.mxu0 %v621
        %641 = vmatpush1.bf16.msra.mxu0 %v620
        %642 = vmatprep.subr.bf16.mxu0 0
        %643 = vmatpush1.bf16.msra.mxu0 0
        %644 = vmatprep.subr.bf16.mxu0 0
        %645 = vmatpush1.bf16.msra.mxu0 0
        %646 = vmatprep.subr.bf16.mxu0 0
        %647 = vmatpush1.bf16.msra.mxu0 0
        %648 = vmatprep.subr.bf16.mxu0 0
        %649 = vmatpush1.bf16.msra.mxu0 0
        %650 = vmatprep.subr.bf16.mxu0 0
        %651 = vmatpush1.bf16.msra.mxu0 0
        %652 = vmatprep.subr.bf16.mxu0 0
        %653 = vmatpush1.bf16.msra.mxu0 0
        %654 = vmatprep.subr.bf16.mxu0 0
        %655 = vmatpush1.bf16.msra.mxu0 0
        %656 = vmatprep.subr.bf16.mxu0 0
        %657 = vmatpush1.bf16.msra.mxu0 0
        %658 = vmatprep.subr.bf16.mxu0 0
        %659 = vmatpush1.bf16.msra.mxu0 0
        %660 = vmatprep.subr.bf16.mxu0 0
        %661 = vmatpush1.bf16.msra.mxu0 0
        %662 = vmatprep.subr.bf16.mxu0 0
        %663 = vmatpush1.bf16.msra.mxu0 0
        %664 = vmatprep.subr.bf16.mxu0 0
        %665 = vmatpush1.bf16.msra.mxu0 0
        %666 = vmatprep.subr.bf16.mxu0 0
        %667 = vmatpush1.bf16.msra.mxu0 0
        %668 = vmatprep.subr.bf16.mxu0 0
        %669 = vmatpush1.bf16.msra.mxu0 0
        %670 = vmatprep.mubr.bf16.mxu0 0
        %671 = vmatmul.mubr.bf16.gmra.mrb[0].mxu0 %v633
        %v672 = vpop.f32.mrb[0].mxu0
        %v673 = vadd.f32 0.0, %v672
        %v674 = vpop.f32.mrb[0].mxu0
        %v675 = vadd.f32 0.0, %v674
        %v676 = vpop.f32.mrb[0].mxu0
        %v677 = vadd.f32 0.0, %v676
        %v678 = vpop.f32.mrb[0].mxu0
        %v679 = vadd.f32 0.0, %v678
        %680 = vmatprep.mubr.bf16.mxu0 0
        %681 = vmatmul.mubr.bf16.gmra.mrb[0].mxu0 %v636
        %v682 = vpop.f32.mrb[0].mxu0
        %v683 = vadd.f32 0.0, %v682
        %v684 = vpop.f32.mrb[0].mxu0
        %v685 = vadd.f32 0.0, %v684
        %v686 = vpop.f32.mrb[0].mxu0
        %v687 = vadd.f32 0.0, %v686
        %v688 = vpop.f32.mrb[0].mxu0
        %v689 = vadd.f32 0.0, %v688
        %690 = vdwg.mxu0
        %v691 = vpack.c.bf16 %v334, %v332
        %v692 = vpack.c.bf16 %v335, %v333
        %v693 = vpack.c.bf16 %v338, %v336
        %v694 = vpack.c.bf16 %v339, %v337
        %v699 = vunpack.c.l.b16 %v458
        %v700 = vunpack.c.l.b16 %v459
        %v701 = vunpack.c.l.b16 %v460
        %v702 = vunpack.c.l.b16 %v461
        %v703 = vpack.c.b16 %v700, %v699
        %v704 = vpack.c.b16 %v702, %v701
        %v706 = vsel %vm490, %v703, 0
        %v709 = vsel %vm490, %v704, 0
        %711 = vmatprep.subr.bf16.mxu0 %v692
        %712 = vmatpush1.bf16.msra.mxu0 %v691
        %713 = vmatprep.subr.bf16.mxu0 %v694
        %714 = vmatpush1.bf16.msra.mxu0 %v693
        %715 = vmatprep.subr.bf16.mxu0 0
        %716 = vmatpush1.bf16.msra.mxu0 0
        %717 = vmatprep.subr.bf16.mxu0 0
        %718 = vmatpush1.bf16.msra.mxu0 0
        %719 = vmatprep.subr.bf16.mxu0 0
        %720 = vmatpush1.bf16.msra.mxu0 0
        %721 = vmatprep.subr.bf16.mxu0 0
        %722 = vmatpush1.bf16.msra.mxu0 0
        %723 = vmatprep.subr.bf16.mxu0 0
        %724 = vmatpush1.bf16.msra.mxu0 0
        %725 = vmatprep.subr.bf16.mxu0 0
        %726 = vmatpush1.bf16.msra.mxu0 0
        %727 = vmatprep.subr.bf16.mxu0 0
        %728 = vmatpush1.bf16.msra.mxu0 0
        %729 = vmatprep.subr.bf16.mxu0 0
        %730 = vmatpush1.bf16.msra.mxu0 0
        %731 = vmatprep.subr.bf16.mxu0 0
        %732 = vmatpush1.bf16.msra.mxu0 0
        %733 = vmatprep.subr.bf16.mxu0 0
        %734 = vmatpush1.bf16.msra.mxu0 0
        %735 = vmatprep.subr.bf16.mxu0 0
        %736 = vmatpush1.bf16.msra.mxu0 0
        %737 = vmatprep.subr.bf16.mxu0 0
        %738 = vmatpush1.bf16.msra.mxu0 0
        %739 = vmatprep.subr.bf16.mxu0 0
        %740 = vmatpush1.bf16.msra.mxu0 0
        %741 = vmatprep.subr.bf16.mxu0 0
        %742 = vmatpush1.bf16.msra.mxu0 0
        %743 = vmatprep.mubr.bf16.mxu0 0
        %744 = vmatmul.mubr.bf16.gmra.mrb[0].mxu0 %v706
        %v745 = vpop.f32.mrb[0].mxu0
        %v746 = vadd.f32 0.0, %v745
        %v747 = vpop.f32.mrb[0].mxu0
        %v748 = vadd.f32 0.0, %v747
        %v749 = vpop.f32.mrb[0].mxu0
        %v750 = vadd.f32 0.0, %v749
        %v751 = vpop.f32.mrb[0].mxu0
        %v752 = vadd.f32 0.0, %v751
        %753 = vmatprep.mubr.bf16.mxu0 0
        %754 = vmatmul.mubr.bf16.gmra.mrb[0].mxu0 %v709
        %v755 = vpop.f32.mrb[0].mxu0
        %v756 = vadd.f32 0.0, %v755
        %v757 = vpop.f32.mrb[0].mxu0
        %v758 = vadd.f32 0.0, %v757
        %v759 = vpop.f32.mrb[0].mxu0
        %v760 = vadd.f32 0.0, %v759
        %v761 = vpop.f32.mrb[0].mxu0
        %v762 = vadd.f32 0.0, %v761
        %763 = vdwg.mxu0
        %v764 = vpack.c.bf16 %v559, %v556
        %v765 = vpack.c.bf16 %v567, %v564
        %v766 = vpack.c.bf16 %v575, %v572
        %v767 = vpack.c.bf16 %v583, %v580
        %v768 = vpack.c.bf16 %v591, %v588
        %v769 = vpack.c.bf16 %v599, %v596
        %v770 = vpack.c.bf16 %v607, %v604
        %v771 = vpack.c.bf16 %v615, %v612
        %v772 = vpack.c.bf16 %v677, %v673
        %v773 = vpack.c.bf16 %v679, %v675
        %v774 = vpack.c.bf16 %v687, %v683
        %v775 = vpack.c.bf16 %v689, %v685
        %v777 = vsel %vm490, %v764, 0
        %v780 = vsel %vm490, %v765, 0
        %v783 = vsel %vm490, %v766, 0
        %v786 = vsel %vm490, %v767, 0
        %v789 = vsel %vm490, %v768, 0
        %v792 = vsel %vm490, %v769, 0
        %v795 = vsel %vm490, %v770, 0
        %v798 = vsel %vm490, %v771, 0
        %800 = vmatprep.subr.bf16.mxu0 %v773
        %801 = vmatpush1.bf16.msra.mxu0 %v772
        %802 = vmatprep.subr.bf16.mxu0 %v775
        %803 = vmatpush1.bf16.msra.mxu0 %v774
        %804 = vmatprep.subr.bf16.mxu0 0
        %805 = vmatpush1.bf16.msra.mxu0 0
        %806 = vmatprep.subr.bf16.mxu0 0
        %807 = vmatpush1.bf16.msra.mxu0 0
        %808 = vmatprep.subr.bf16.mxu0 0
        %809 = vmatpush1.bf16.msra.mxu0 0
        %810 = vmatprep.subr.bf16.mxu0 0
        %811 = vmatpush1.bf16.msra.mxu0 0
        %812 = vmatprep.subr.bf16.mxu0 0
        %813 = vmatpush1.bf16.msra.mxu0 0
        %814 = vmatprep.subr.bf16.mxu0 0
        %815 = vmatpush1.bf16.msra.mxu0 0
        %816 = vmatprep.subr.bf16.mxu0 0
        %817 = vmatpush1.bf16.msra.mxu0 0
        %818 = vmatprep.subr.bf16.mxu0 0
        %819 = vmatpush1.bf16.msra.mxu0 0
        %820 = vmatprep.subr.bf16.mxu0 0
        %821 = vmatpush1.bf16.msra.mxu0 0
        %822 = vmatprep.subr.bf16.mxu0 0
        %823 = vmatpush1.bf16.msra.mxu0 0
        %824 = vmatprep.subr.bf16.mxu0 0
        %825 = vmatpush1.bf16.msra.mxu0 0
        %826 = vmatprep.subr.bf16.mxu0 0
        %827 = vmatpush1.bf16.msra.mxu0 0
        %828 = vmatprep.subr.bf16.mxu0 0
        %829 = vmatpush1.bf16.msra.mxu0 0
        %830 = vmatprep.subr.bf16.mxu0 0
        %831 = vmatpush1.bf16.msra.mxu0 0
        %832 = vmatprep.mubr.bf16.mxu0 0
        %833 = vmatmul.mubr.bf16.gmra.mrb[0].mxu0 %v777
        %v834 = vpop.f32.mrb[0].mxu0
        %v835 = vadd.f32 0.0, %v834
        %v836 = vpop.f32.mrb[0].mxu0
        %v837 = vadd.f32 0.0, %v836
        %v838 = vpop.f32.mrb[0].mxu0
        %v839 = vadd.f32 0.0, %v838
        %v840 = vpop.f32.mrb[0].mxu0
        %v841 = vadd.f32 0.0, %v840
        %842 = vmatprep.mubr.bf16.mxu0 0
        %843 = vmatmul.mubr.bf16.gmra.mrb[0].mxu0 %v780
        %v844 = vpop.f32.mrb[0].mxu0
        %v845 = vadd.f32 0.0, %v844
        %v846 = vpop.f32.mrb[0].mxu0
        %v847 = vadd.f32 0.0, %v846
        %v848 = vpop.f32.mrb[0].mxu0
        %v849 = vadd.f32 0.0, %v848
        %v850 = vpop.f32.mrb[0].mxu0
        %v851 = vadd.f32 0.0, %v850
        %852 = vmatprep.mubr.bf16.mxu0 0
        %853 = vmatmul.mubr.bf16.gmra.mrb[0].mxu0 %v783
        %v854 = vpop.f32.mrb[0].mxu0
        %v855 = vadd.f32 0.0, %v854
        %v856 = vpop.f32.mrb[0].mxu0
        %v857 = vadd.f32 0.0, %v856
        %v858 = vpop.f32.mrb[0].mxu0
        %v859 = vadd.f32 0.0, %v858
        %v860 = vpop.f32.mrb[0].mxu0
        %v861 = vadd.f32 0.0, %v860
        %862 = vmatprep.mubr.bf16.mxu0 0
        %863 = vmatmul.mubr.bf16.gmra.mrb[0].mxu0 %v786
        %v864 = vpop.f32.mrb[0].mxu0
        %v865 = vadd.f32 0.0, %v864
        %v866 = vpop.f32.mrb[0].mxu0
        %v867 = vadd.f32 0.0, %v866
        %v868 = vpop.f32.mrb[0].mxu0
        %v869 = vadd.f32 0.0, %v868
        %v870 = vpop.f32.mrb[0].mxu0
        %v871 = vadd.f32 0.0, %v870
        %872 = vmatprep.mubr.bf16.mxu0 0
        %873 = vmatmul.mubr.bf16.gmra.mrb[0].mxu0 %v789
        %v874 = vpop.f32.mrb[0].mxu0
        %v875 = vadd.f32 0.0, %v874
        %v876 = vpop.f32.mrb[0].mxu0
        %v877 = vadd.f32 0.0, %v876
        %v878 = vpop.f32.mrb[0].mxu0
        %v879 = vadd.f32 0.0, %v878
        %v880 = vpop.f32.mrb[0].mxu0
        %v881 = vadd.f32 0.0, %v880
        %882 = vmatprep.mubr.bf16.mxu0 0
        %883 = vmatmul.mubr.bf16.gmra.mrb[0].mxu0 %v792
        %v884 = vpop.f32.mrb[0].mxu0
        %v885 = vadd.f32 0.0, %v884
        %v886 = vpop.f32.mrb[0].mxu0
        %v887 = vadd.f32 0.0, %v886
        %v888 = vpop.f32.mrb[0].mxu0
        %v889 = vadd.f32 0.0, %v888
        %v890 = vpop.f32.mrb[0].mxu0
        %v891 = vadd.f32 0.0, %v890
        %892 = vmatprep.mubr.bf16.mxu0 0
        %893 = vmatmul.mubr.bf16.gmra.mrb[0].mxu0 %v795
        %v894 = vpop.f32.mrb[0].mxu0
        %v895 = vadd.f32 0.0, %v894
        %v896 = vpop.f32.mrb[0].mxu0
        %v897 = vadd.f32 0.0, %v896
        %v898 = vpop.f32.mrb[0].mxu0
        %v899 = vadd.f32 0.0, %v898
        %v900 = vpop.f32.mrb[0].mxu0
        %v901 = vadd.f32 0.0, %v900
        %902 = vmatprep.mubr.bf16.mxu0 0
        %903 = vmatmul.mubr.bf16.gmra.mrb[0].mxu0 %v798
        %v904 = vpop.f32.mrb[0].mxu0
        %v905 = vadd.f32 0.0, %v904
        %v906 = vpop.f32.mrb[0].mxu0
        %v907 = vadd.f32 0.0, %v906
        %v908 = vpop.f32.mrb[0].mxu0
        %v909 = vadd.f32 0.0, %v908
        %v910 = vpop.f32.mrb[0].mxu0
        %v911 = vadd.f32 0.0, %v910
        %912 = vdwg.mxu0
        %v913 = vmul.f32 %v835, 0.17677669
        %v914 = vmul.f32 %v837, 0.17677669
        %v915 = vmul.f32 %v839, 0.17677669
        %v916 = vmul.f32 %v841, 0.17677669
        %v917 = vmul.f32 %v845, 0.17677669
        %v918 = vmul.f32 %v847, 0.17677669
        %v919 = vmul.f32 %v849, 0.17677669
        %v920 = vmul.f32 %v851, 0.17677669
        %v921 = vmul.f32 %v855, 0.17677669
        %v922 = vmul.f32 %v857, 0.17677669
        %v923 = vmul.f32 %v859, 0.17677669
        %v924 = vmul.f32 %v861, 0.17677669
        %v925 = vmul.f32 %v865, 0.17677669
        %v926 = vmul.f32 %v867, 0.17677669
        %v927 = vmul.f32 %v869, 0.17677669
        %v928 = vmul.f32 %v871, 0.17677669
        %v929 = vmul.f32 %v875, 0.17677669
        %v930 = vmul.f32 %v877, 0.17677669
        %v931 = vmul.f32 %v879, 0.17677669
        %v932 = vmul.f32 %v881, 0.17677669
        %v933 = vmul.f32 %v885, 0.17677669
        %v934 = vmul.f32 %v887, 0.17677669
        %v935 = vmul.f32 %v889, 0.17677669
        %v936 = vmul.f32 %v891, 0.17677669
        %v937 = vmul.f32 %v895, 0.17677669
        %v938 = vmul.f32 %v897, 0.17677669
        %v939 = vmul.f32 %v899, 0.17677669
        %v940 = vmul.f32 %v901, 0.17677669
        %v941 = vmul.f32 %v905, 0.17677669
        %v942 = vmul.f32 %v907, 0.17677669
        %v943 = vmul.f32 %v909, 0.17677669
        %v944 = vmul.f32 %v911, 0.17677669
        %v945 = vmax.f32 %v913, %v914
        %946 = vmax.xlane.f32.xlu0 %v945
        %v947 = vpop.xlane.xlu0 %946
        %v948 = vmax.f32 %v915, %v916
        %949 = vmax.xlane.f32.xlu0 %v948
        %v950 = vpop.xlane.xlu0 %949
        %v951 = vmax.f32 %v917, %v918
        %952 = vmax.xlane.f32.xlu0 %v951
        %v953 = vpop.xlane.xlu0 %952
        %v954 = vmax.f32 %v919, %v920
        %955 = vmax.xlane.f32.xlu0 %v954
        %v956 = vpop.xlane.xlu0 %955
        %v957 = vmax.f32 %v921, %v922
        %958 = vmax.xlane.f32.xlu0 %v957
        %v959 = vpop.xlane.xlu0 %958
        %v960 = vmax.f32 %v923, %v924
        %961 = vmax.xlane.f32.xlu0 %v960
        %v962 = vpop.xlane.xlu0 %961
        %v963 = vmax.f32 %v925, %v926
        %964 = vmax.xlane.f32.xlu0 %v963
        %v965 = vpop.xlane.xlu0 %964
        %v966 = vmax.f32 %v927, %v928
        %967 = vmax.xlane.f32.xlu0 %v966
        %v968 = vpop.xlane.xlu0 %967
        %v969 = vmax.f32 %v929, %v930
        %970 = vmax.xlane.f32.xlu0 %v969
        %v971 = vpop.xlane.xlu0 %970
        %v972 = vmax.f32 %v931, %v932
        %973 = vmax.xlane.f32.xlu0 %v972
        %v974 = vpop.xlane.xlu0 %973
        %v975 = vmax.f32 %v933, %v934
        %976 = vmax.xlane.f32.xlu0 %v975
        %v977 = vpop.xlane.xlu0 %976
        %v978 = vmax.f32 %v935, %v936
        %979 = vmax.xlane.f32.xlu0 %v978
        %v980 = vpop.xlane.xlu0 %979
        %v981 = vmax.f32 %v937, %v938
        %982 = vmax.xlane.f32.xlu0 %v981
        %v983 = vpop.xlane.xlu0 %982
        %v984 = vmax.f32 %v939, %v940
        %985 = vmax.xlane.f32.xlu0 %v984
        %v986 = vpop.xlane.xlu0 %985
        %v987 = vmax.f32 %v941, %v942
        %988 = vmax.xlane.f32.xlu0 %v987
        %v989 = vpop.xlane.xlu0 %988
        %v990 = vmax.f32 %v943, %v944
        %991 = vmax.xlane.f32.xlu0 %v990
        %v992 = vpop.xlane.xlu0 %991
        %v993 = vsub.f32 %v913, %v947
        %v994 = vsub.f32 %v914, %v947
        %v995 = vsub.f32 %v915, %v950
        %v996 = vsub.f32 %v916, %v950
        %v997 = vsub.f32 %v917, %v953
        %v998 = vsub.f32 %v918, %v953
        %v999 = vsub.f32 %v919, %v956
        %v1000 = vsub.f32 %v920, %v956
        %v1001 = vsub.f32 %v921, %v959
        %v1002 = vsub.f32 %v922, %v959
        %v1003 = vsub.f32 %v923, %v962
        %v1004 = vsub.f32 %v924, %v962
        %v1005 = vsub.f32 %v925, %v965
        %v1006 = vsub.f32 %v926, %v965
        %v1007 = vsub.f32 %v927, %v968
        %v1008 = vsub.f32 %v928, %v968
        %v1009 = vsub.f32 %v929, %v971
        %v1010 = vsub.f32 %v930, %v971
        %v1011 = vsub.f32 %v931, %v974
        %v1012 = vsub.f32 %v932, %v974
        %v1013 = vsub.f32 %v933, %v977
        %v1014 = vsub.f32 %v934, %v977
        %v1015 = vsub.f32 %v935, %v980
        %v1016 = vsub.f32 %v936, %v980
        %v1017 = vsub.f32 %v937, %v983
        %v1018 = vsub.f32 %v938, %v983
        %v1019 = vsub.f32 %v939, %v986
        %v1020 = vsub.f32 %v940, %v986
        %v1021 = vsub.f32 %v941, %v989
        %v1022 = vsub.f32 %v942, %v989
        %v1023 = vsub.f32 %v943, %v992
        %v1024 = vsub.f32 %v944, %v992
        %v1025 = vmul.f32 %v993, 1.442695
        %v1026 = vpow.pop %v1025
        %v1027 = vmul.f32 %v994, 1.442695
        %v1028 = vpow.pop %v1027
        %v1029 = vmul.f32 %v995, 1.442695
        %v1030 = vpow.pop %v1029
        %v1031 = vmul.f32 %v996, 1.442695
        %v1032 = vpow.pop %v1031
        %v1033 = vmul.f32 %v997, 1.442695
        %v1034 = vpow.pop %v1033
        %v1035 = vmul.f32 %v998, 1.442695
        %v1036 = vpow.pop %v1035
        %v1037 = vmul.f32 %v999, 1.442695
        %v1038 = vpow.pop %v1037
        %v1039 = vmul.f32 %v1000, 1.442695
        %v1040 = vpow.pop %v1039
        %v1041 = vmul.f32 %v1001, 1.442695
        %v1042 = vpow.pop %v1041
        %v1043 = vmul.f32 %v1002, 1.442695
        %v1044 = vpow.pop %v1043
        %v1045 = vmul.f32 %v1003, 1.442695
        %v1046 = vpow.pop %v1045
        %v1047 = vmul.f32 %v1004, 1.442695
        %v1048 = vpow.pop %v1047
        %v1049 = vmul.f32 %v1005, 1.442695
        %v1050 = vpow.pop %v1049
        %v1051 = vmul.f32 %v1006, 1.442695
        %v1052 = vpow.pop %v1051
        %v1053 = vmul.f32 %v1007, 1.442695
        %v1054 = vpow.pop %v1053
        %v1055 = vmul.f32 %v1008, 1.442695
        %v1056 = vpow.pop %v1055
        %v1057 = vmul.f32 %v1009, 1.442695
        %v1058 = vpow.pop %v1057
        %v1059 = vmul.f32 %v1010, 1.442695
        %v1060 = vpow.pop %v1059
        %v1061 = vmul.f32 %v1011, 1.442695
        %v1062 = vpow.pop %v1061
        %v1063 = vmul.f32 %v1012, 1.442695
        %v1064 = vpow.pop %v1063
        %v1065 = vmul.f32 %v1013, 1.442695
        %v1066 = vpow.pop %v1065
        %v1067 = vmul.f32 %v1014, 1.442695
        %v1068 = vpow.pop %v1067
        %v1069 = vmul.f32 %v1015, 1.442695
        %v1070 = vpow.pop %v1069
        %v1071 = vmul.f32 %v1016, 1.442695
        %v1072 = vpow.pop %v1071
        %v1073 = vmul.f32 %v1017, 1.442695
        %v1074 = vpow.pop %v1073
        %v1075 = vmul.f32 %v1018, 1.442695
        %v1076 = vpow.pop %v1075
        %v1077 = vmul.f32 %v1019, 1.442695
        %v1078 = vpow.pop %v1077
        %v1079 = vmul.f32 %v1020, 1.442695
        %v1080 = vpow.pop %v1079
        %v1081 = vmul.f32 %v1021, 1.442695
        %v1082 = vpow.pop %v1081
        %v1083 = vmul.f32 %v1022, 1.442695
        %v1084 = vpow.pop %v1083
        %v1085 = vmul.f32 %v1023, 1.442695
        %v1086 = vpow.pop %v1085
        %v1087 = vmul.f32 %v1024, 1.442695
        %v1088 = vpow.pop %v1087
        %v1089 = vpack.c.bf16 %v1030, %v1026
        %v1090 = vpack.c.bf16 %v1032, %v1028
        %v1091 = vpack.c.bf16 %v1038, %v1034
        %v1092 = vpack.c.bf16 %v1040, %v1036
        %v1093 = vpack.c.bf16 %v1046, %v1042
        %v1094 = vpack.c.bf16 %v1048, %v1044
        %v1095 = vpack.c.bf16 %v1054, %v1050
        %v1096 = vpack.c.bf16 %v1056, %v1052
        %v1097 = vpack.c.bf16 %v1062, %v1058
        %v1098 = vpack.c.bf16 %v1064, %v1060
        %v1099 = vpack.c.bf16 %v1070, %v1066
        %v1100 = vpack.c.bf16 %v1072, %v1068
        %v1101 = vpack.c.bf16 %v1078, %v1074
        %v1102 = vpack.c.bf16 %v1080, %v1076
        %v1103 = vpack.c.bf16 %v1086, %v1082
        %v1104 = vpack.c.bf16 %v1088, %v1084
        %v1105 = vpack.c.bf16 %v750, %v746
        %v1106 = vpack.c.bf16 %v752, %v748
        %v1107 = vpack.c.bf16 %v760, %v756
        %v1108 = vpack.c.bf16 %v762, %v758
        %v1109 = vmul.f32 %v746, %v746
        %v1110 = vmul.f32 %v748, %v748
        %v1111 = vmul.f32 %v750, %v750
        %v1112 = vmul.f32 %v752, %v752
        %v1113 = vmul.f32 %v756, %v756
        %v1114 = vmul.f32 %v758, %v758
        %v1115 = vmul.f32 %v760, %v760
        %v1116 = vmul.f32 %v762, %v762
        %v1117 = vpack.c.bf16 %v1111, %v1109
        %v1118 = vpack.c.bf16 %v1112, %v1110
        %v1119 = vpack.c.bf16 %v1115, %v1113
        %v1120 = vpack.c.bf16 %v1116, %v1114
        %1121 = vmatprep.subr.bf16.mxu0 %v1090
        %1122 = vmatpush1.bf16.xpose.msra.mxu0 %v1089
        %1123 = vmatprep.subr.bf16.mxu0 %v1092
        %1124 = vmatpush1.bf16.xpose.msra.mxu0 %v1091
        %1125 = vmatprep.subr.bf16.mxu0 %v1094
        %1126 = vmatpush1.bf16.xpose.msra.mxu0 %v1093
        %1127 = vmatprep.subr.bf16.mxu0 %v1096
        %1128 = vmatpush1.bf16.xpose.msra.mxu0 %v1095
        %1129 = vmatprep.subr.bf16.mxu0 %v1098
        %1130 = vmatpush1.bf16.xpose.msra.mxu0 %v1097
        %1131 = vmatprep.subr.bf16.mxu0 %v1100
        %1132 = vmatpush1.bf16.xpose.msra.mxu0 %v1099
        %1133 = vmatprep.subr.bf16.mxu0 %v1102
        %1134 = vmatpush1.bf16.xpose.msra.mxu0 %v1101
        %1135 = vmatprep.subr.bf16.mxu0 %v1104
        %1136 = vmatpush1.bf16.xpose.msra.mxu0 %v1103
        %1137 = vmatprep.subr.bf16.mxu0 0
        %1138 = vmatpush1.bf16.xpose.msra.mxu0 0
        %1139 = vmatprep.subr.bf16.mxu0 0
        %1140 = vmatpush1.bf16.xpose.msra.mxu0 0
        %1141 = vmatprep.subr.bf16.mxu0 0
        %1142 = vmatpush1.bf16.xpose.msra.mxu0 0
        %1143 = vmatprep.subr.bf16.mxu0 0
        %1144 = vmatpush1.bf16.xpose.msra.mxu0 0
        %1145 = vmatprep.subr.bf16.mxu0 0
        %1146 = vmatpush1.bf16.xpose.msra.mxu0 0
        %1147 = vmatprep.subr.bf16.mxu0 0
        %1148 = vmatpush1.bf16.xpose.msra.mxu0 0
        %1149 = vmatprep.subr.bf16.mxu0 0
        %1150 = vmatpush1.bf16.xpose.msra.mxu0 0
        %1151 = vmatprep.subr.bf16.mxu0 0
        %1152 = vmatpush1.bf16.xpose.msra.mxu0 0
        %1153 = vmatprep.mubr.bf16.mxu0 %v1106
        %1154 = vmatmul.mubr.bf16.gmra.mrb[0].mxu0 %v1105
        %v1155 = vpop.f32.mrb[0].mxu0
        %v1156 = vadd.f32 0.0, %v1155
        %v1157 = vpop.f32.mrb[0].mxu0
        %v1158 = vpop.f32.mrb[0].mxu0
        %v1159 = vadd.f32 0.0, %v1158
        %v1160 = vpop.f32.mrb[0].mxu0
        %1161 = vmatprep.mubr.bf16.mxu0 %v1108
        %1162 = vmatmul.mubr.bf16.gmra.mrb[0].mxu0 %v1107
        %v1163 = vpop.f32.mrb[0].mxu0
        %v1164 = vadd.f32 0.0, %v1163
        %v1165 = vpop.f32.mrb[0].mxu0
        %v1166 = vpop.f32.mrb[0].mxu0
        %v1167 = vadd.f32 0.0, %v1166
        %v1168 = vpop.f32.mrb[0].mxu0
        %1169 = vmatprep.mubr.bf16.mxu0 %v1118
        %1170 = vmatmul.mubr.bf16.gmra.mrb[0].mxu0 %v1117
        %v1171 = vpop.f32.mrb[0].mxu0
        %v1172 = vadd.f32 0.0, %v1171
        %v1173 = vpop.f32.mrb[0].mxu0
        %v1174 = vpop.f32.mrb[0].mxu0
        %v1175 = vadd.f32 0.0, %v1174
        %v1176 = vpop.f32.mrb[0].mxu0
        %1177 = vmatprep.mubr.bf16.mxu0 %v1120
        %1178 = vmatmul.mubr.bf16.gmra.mrb[0].mxu0 %v1119
        %v1179 = vpop.f32.mrb[0].mxu0
        %v1180 = vadd.f32 0.0, %v1179
        %v1181 = vpop.f32.mrb[0].mxu0
        %v1182 = vpop.f32.mrb[0].mxu0
        %v1183 = vadd.f32 0.0, %v1182
        %v1184 = vpop.f32.mrb[0].mxu0
        %1185 = vmatprep.mubr.bf16.mxu0 1065369472
        %1186 = vmatmul.mubr.bf16.gmra.mrb[0].mxu0 1065369472
        %v1187 = vpop.f32.mrb[0].mxu0
        %v1188 = vadd.f32 0.0, %v1187
        %v1189 = vpop.f32.mrb[0].mxu0
        %v1190 = vpop.f32.mrb[0].mxu0
        %v1191 = vpop.f32.mrb[0].mxu0
        %1192 = vdwg.mxu0
        %v1193 = vrcp.pop %v1188
        %v1194 = vlaneseq
        %v1195 = vshrl.u32 %v1194, 7
        %v1196 = vsub.s32 0, %v1195
        %v1197 = vrot.slane %v1193, %v1196
        %v1198 = vmul.f32 %v1156, %v1197
        %v1199 = vmul.f32 %v1159, %v1197
        %v1200 = vmul.f32 %v1164, %v1197
        %v1201 = vmul.f32 %v1167, %v1197
        %v1202 = vmul.f32 %v1172, %v1197
        %v1203 = vmul.f32 %v1175, %v1197
        %v1204 = vmul.f32 %v1180, %v1197
        %v1205 = vmul.f32 %v1183, %v1197
        %v1206 = vmul.f32 %v1198, %v1198
        %v1207 = vmul.f32 %v1199, %v1199
        %v1208 = vmul.f32 %v1200, %v1200
        %v1209 = vmul.f32 %v1201, %v1201
        %v1210 = vsub.f32 %v1202, %v1206
        %v1211 = vsub.f32 %v1203, %v1207
        %v1212 = vsub.f32 %v1204, %v1208
        %v1213 = vsub.f32 %v1205, %v1209
        %v1214 = vmax.f32 %v1210, 0.0
        %v1215 = vmax.f32 %v1211, 0.0
        %v1216 = vmax.f32 %v1212, 0.0
        %v1217 = vmax.f32 %v1213, 0.0
        %1218 = vadd.xlane.f32.xlu0 %v1198
        %v1219 = vpop.xlane.xlu0 %1218
        %1220 = vadd.xlane.f32.xlu0 %v1199
        %v1221 = vpop.xlane.xlu0 %1220
        %1222 = vadd.xlane.f32.xlu0 %v1200
        %v1223 = vpop.xlane.xlu0 %1222
        %1224 = vadd.xlane.f32.xlu0 %v1201
        %v1225 = vpop.xlane.xlu0 %1224
        %v1226 = vmul.f32 %v1219, %v348
        %v1227 = vmul.f32 %v1221, %v348
        %v1228 = vmul.f32 %v1223, %v348
        %v1229 = vmul.f32 %v1225, %v348
        %1230 = vadd.xlane.f32.xlu0 %v1214
        %v1231 = vpop.xlane.xlu0 %1230
        %1232 = vadd.xlane.f32.xlu0 %v1215
        %v1233 = vpop.xlane.xlu0 %1232
        %1234 = vadd.xlane.f32.xlu0 %v1216
        %v1235 = vpop.xlane.xlu0 %1234
        %1236 = vadd.xlane.f32.xlu0 %v1217
        %v1237 = vpop.xlane.xlu0 %1236
        %v1238 = vmul.f32 %v1231, %v348
        %v1239 = vmul.f32 %v1233, %v348
        %v1240 = vmul.f32 %v1235, %v348
        %v1241 = vmul.f32 %v1237, %v348
        %v1242 = vrsqrt.pop %v1238
        %v1243 = vmul.f32 %v1238, %v1242
        %vm1244 = vcmp.eq.f32.partialorder %v1238, inf
        %v1245 = vsel %vm1244, %v1238, %v1243
        %vm1246 = vcmp.eq.f32.partialorder %v1238, 0.0
        %v1247 = vand.u32 %v1238, 2147483648
        %v1248 = vsel %vm1246, %v1247, %v1245
        %v1249 = vrsqrt.pop %v1239
        %v1250 = vmul.f32 %v1239, %v1249
        %vm1251 = vcmp.eq.f32.partialorder %v1239, inf
        %v1252 = vsel %vm1251, %v1239, %v1250
        %vm1253 = vcmp.eq.f32.partialorder %v1239, 0.0
        %v1254 = vand.u32 %v1239, 2147483648
        %v1255 = vsel %vm1253, %v1254, %v1252
        %v1256 = vrsqrt.pop %v1240
        %v1257 = vmul.f32 %v1240, %v1256
        %vm1258 = vcmp.eq.f32.partialorder %v1240, inf
        %v1259 = vsel %vm1258, %v1240, %v1257
        %vm1260 = vcmp.eq.f32.partialorder %v1240, 0.0
        %v1261 = vand.u32 %v1240, 2147483648
        %v1262 = vsel %vm1260, %v1261, %v1259
        %v1263 = vrsqrt.pop %v1241
        %v1264 = vmul.f32 %v1241, %v1263
        %vm1265 = vcmp.eq.f32.partialorder %v1241, inf
        %v1266 = vsel %vm1265, %v1241, %v1264
        %vm1267 = vcmp.eq.f32.partialorder %v1241, 0.0
        %v1268 = vand.u32 %v1241, 2147483648
        %v1269 = vsel %vm1267, %v1268, %v1266
        %v1270 = vmul.f32 %v1248, %v381
        %v1271 = vmul.f32 %v1255, %v382
        %v1272 = vmul.f32 %v1262, %v383
        %v1273 = vmul.f32 %v1269, %v384
        %v1274 = vadd.f32 %v1270, %v1226
        %v1275 = vadd.f32 %v1271, %v1227
        %v1276 = vadd.f32 %v1272, %v1228
        %v1277 = vadd.f32 %v1273, %v1229
        %1278 = vst [vmem:[%s325] sm:$0xff] %v1274
        %1279 = vst [vmem:[%s325 + $0x8] sm:$0xff] %v1275
        %1280 = vst [vmem:[%s325 + $0x10] sm:$0xff] %v1276
        %1281 = vst [vmem:[%s325 + $0x18] sm:$0xff] %v1277
        %s1282 = sand.u32 %s149, 1
        %s1283 = scalar_lea.sflag [#allocation4], %s1282
        %s1284 = sand.u32 %s149, 1
        %s1285 = smul.addr %s1284, 32
        %s1286 = scalar_lea.vmem [#allocation11], %s1285
        // Predicated region
        $region61: #{tpu_custom_call.1} parent=39 // pred_check
          %p1287 = pneg %p159
        $region62: #{tpu_custom_call.1} parent=39 // pred_check_branch
          %1289 = sbr.rel (%p1287) target = $region64
        $region63: #{tpu_custom_call.1} parent=39 // pred_region
          %s1291 = ssub.s32 512, 512
          %1292 = vsyncadd %s1283, %s1291
          %s1293 = smul.addr %s26, 4
          %s1294 = smul.addr %s1293, 128
          %s1295 = scalar_lea.hbm %s5, %s1294
          %s1296 = sshll.u32 %s1286, 4
          %s1297 = int_to_ptr.vmem [resolvable:$true] %s1296
          %1302 = dma.vmem_to_hbm [thread:$0]  %s1297, 512, %s1295, %s1283, 128, 128, 8
        $region64: #{tpu_custom_call.1} parent=39 // pred_fallthru
          _
      $region40: #{tpu_custom_call.1} parent=5 // pred_fallthru
        _
      %p1303 = scmp.le.s32.totalorder 2, %s21
      // Predicated region
      $region65: #{tpu_custom_call.1} parent=5 // pred_check
        %p1304 = pneg %p1303
      $region66: #{tpu_custom_call.1} parent=5 // pred_check_branch
        %1306 = sbr.rel (%p1304) target = $region68
      $region67: #{tpu_custom_call.1} parent=5 // pred_region
        %s1307 = ssub.s32 %s21, 2
        // Predicated region
        $region69: #{tpu_custom_call.1} parent=67 // pred_check
          %p1308 = pneg %p165
        $region70: #{tpu_custom_call.1} parent=67 // pred_check_branch
          %1310 = sbr.rel (%p1308) target = $region72
        $region71: #{tpu_custom_call.1} parent=67 // pred_region
          %s1311 = sand.u32 %s150, 1
          %s1312 = scalar_lea.sflag [#allocation4], %s1311
          %s1313 = sand.u32 %s150, 1
          %s1314 = smul.addr %s1313, 32
          %s1315 = scalar_lea.vmem [#allocation11], %s1314
          %1316 = dma.done %s1312, 512
        $region72: #{tpu_custom_call.1} parent=67 // pred_fallthru
          _
      $region68: #{tpu_custom_call.1} parent=5 // pred_fallthru
        _
    $region6: #{tpu_custom_call.1} parent=1 // loop_footer
      %s25 = sadd.s32 1, %s21
    $region7: #{tpu_custom_call.1} parent=1 // loop_footer_branch
      %20 = sbr.rel target = $region3
    $region8: #{tpu_custom_call.1} parent=1 // loop_exit
      _
    %1317 = vsyncpa [#allocation3], 1
    %s1318 = scalar_lea.sflag [#allocation3], 1
    %1319 = vsyncpa %s1318, 1
    %1320 = vsyncpa [#allocation6], 1
    %s1321 = scalar_lea.sflag [#allocation6], 1
    %1322 = vsyncpa %s1321, 1
    %1323 = vsyncpa [#allocation9], 1
    %1324 = vsyncpa [#allocation4], 1
    %s1325 = scalar_lea.sflag [#allocation4], 1
    %1326 = vsyncpa %s1325, 1

</llo_original>
